<compile_context>
chip_gen: v7x
topology: tpu7x:2x2x1
jax: 0.10.0
libtpu: 0.0.40
codegen_flags: <defaults>
</compile_context>

<pallas_src>
import functools

import jax
import jax.numpy as jnp
from jax.experimental import pallas as pl
from jax.experimental.pallas import tpu as pltpu


def _lstm_decomposer_kernel(
    x_ref,                       # (T*B, D)   bf16, time-major flattened
    wx1_ref, wh1_ref, b1_ref,    # (D,4H) bf16, (H,4H) bf16, (1,4H) f32
    wx2_ref, wh2_ref, b2_ref,    # (H,4H) bf16, (H,4H) bf16, (1,4H) f32
    wA_ref, bA_ref,              # fused head stage 1: (H, 2*H2) bf16, (1, 2*H2) f32
    wB_ref, bB_ref,              # fused head stage 2 (block-diag, lane-padded):
                                 #   (2*H2, NPAD) bf16, (1, NPAD) f32
    out_ref,                     # (T*B, NPAD) f32  (lane-dense)
    h1_ref, h2_ref,              # VMEM scratch: (T*B, H) f32 each
    *, B,
):
    TB = x_ref.shape[0]
    T = TB // B
    H = wh1_ref.shape[0]
    bf16 = jnp.bfloat16

    wh1 = wh1_ref[...]
    wh2 = wh2_ref[...]

    def apply_gates(g, c):
        # Full-vreg nonlinearities (2 EUP pushes instead of 4).  Only a win
        # while B <= 8 and 4H <= 128 (one vreg); switch to per-gate
        # activations if H/B grow.
        sg = jax.nn.sigmoid(g)
        th = jnp.tanh(g)
        i_g = sg[:, 0 * H:1 * H]
        f_g = sg[:, 1 * H:2 * H]
        g_g = th[:, 2 * H:3 * H]
        o_g = sg[:, 3 * H:4 * H]
        c_new = f_g * c + i_g * g_g
        h_new = o_g * jnp.tanh(c_new)
        return h_new, c_new

    zeros = jnp.zeros((B, H), jnp.float32)

    # ---- Layer 1: hoisted input projection (one bulk matmul) + recurrence ----
    gx1 = (jnp.dot(x_ref[...], wx1_ref[...],
                   preferred_element_type=jnp.float32)
           + b1_ref[...])                                        # (T*B, 4H) f32

    h1, c1 = zeros, zeros
    # Statically unrolled time loop (T is small); state lives in vregs, h1_t
    # streamed to scratch so live ranges stay bounded.
    for t in range(T):
        g1 = gx1[t * B:(t + 1) * B, :] + jnp.dot(
            h1.astype(bf16), wh1, preferred_element_type=jnp.float32)
        h1, c1 = apply_gates(g1, c1)
        h1_ref[pl.ds(t * B, B), :] = h1

    # ---- Layer 2: bulk input projection from all h1, then K=H recurrence ----
    gx2 = (jnp.dot(h1_ref[...].astype(bf16), wx2_ref[...],
                   preferred_element_type=jnp.float32)
           + b2_ref[...])                                        # (T*B, 4H) f32

    h2, c2 = zeros, zeros
    for t in range(T):
        g2 = gx2[t * B:(t + 1) * B, :] + jnp.dot(
            h2.astype(bf16), wh2, preferred_element_type=jnp.float32)
        h2, c2 = apply_gates(g2, c2)
        h2_ref[pl.ds(t * B, B), :] = h2

    # ---- Fused MLP heads on the whole sequence, lane-dense padded output ----
    lstm_out = h2_ref[...].astype(bf16)                          # (T*B, H)
    a = jnp.maximum(
        jnp.dot(lstm_out, wA_ref[...], preferred_element_type=jnp.float32)
        + bA_ref[...], 0.0)                                      # (T*B, 2*H2)
    o = (jnp.dot(a.astype(bf16), wB_ref[...],
                 preferred_element_type=jnp.float32)
         + bB_ref[...])                                          # (T*B, NPAD)
    out_ref[...] = o


def lstm_decomposer_forward(column, params):
    """column: (B, T, D) float32 -> (B, 2, T, target_size) float32."""
    B, T, D = column.shape
    H = params["wh1"].shape[0]
    H2 = params["w11"].shape[1]
    TG = params["w12"].shape[1]
    NO = 2 * TG
    NPAD = pl.cdiv(NO, 128) * 128        # lane-dense padded output width
    bf16 = jnp.bfloat16

    # Layout plumbing + weight fusion (pure XLA, outside the kernel).
    x_tm = jnp.transpose(column, (1, 0, 2)).reshape(T * B, D).astype(bf16)

    wA = jnp.concatenate([params["w11"], params["w21"]], axis=1)   # (H, 2*H2)
    bA = jnp.concatenate([params["b11"], params["b21"]], axis=1)   # (1, 2*H2)

    # Block-diagonal second-stage head, zero-padded to NPAD lanes.  At this
    # K/N the extra zero columns / block-diag FLOPs are free on the MXU; split
    # into two matmuls if TG / H2 ever grow.
    wB = jnp.zeros((2 * H2, NPAD), jnp.float32)
    wB = wB.at[:H2, :TG].set(params["w12"])
    wB = wB.at[H2:, TG:NO].set(params["w22"])
    bB = jnp.zeros((1, NPAD), jnp.float32)
    bB = bB.at[:, :TG].set(params["b12"])
    bB = bB.at[:, TG:NO].set(params["b22"])

    args = (x_tm,
            params["wx1"].astype(bf16), params["wh1"].astype(bf16), params["b1"],
            params["wx2"].astype(bf16), params["wh2"].astype(bf16), params["b2"],
            wA.astype(bf16), bA,
            wB.astype(bf16), bB)

    vmem = pl.BlockSpec(memory_space=pltpu.MemorySpace.VMEM)

    out = pl.pallas_call(
        functools.partial(_lstm_decomposer_kernel, B=B),
        out_shape=jax.ShapeDtypeStruct((T * B, NPAD), jnp.float32),
        in_specs=[vmem] * len(args),
        out_specs=vmem,
        scratch_shapes=[pltpu.VMEM((T * B, H), jnp.float32),   # h1_all
                        pltpu.VMEM((T * B, H), jnp.float32)],  # h2_all (lstm_out)
    )(*args)

    # (T*B, NPAD) time-major -> (B, 2, T, TG)  (matches torch.stack([o1,o2],1))
    out = out[:, :NO].reshape(T, B, 2, TG)
    return jnp.transpose(out, (1, 2, 0, 3))


def init_params(key, input_dim, hidden_dim, target_size):
    """Deterministic init mimicking PyTorch shapes (weights pre-transposed)."""
    H, H2 = hidden_dim, hidden_dim // 2
    ks = jax.random.split(key, 14)
    u = lambda k, shape, s: jax.random.uniform(k, shape, jnp.float32, -s, s)
    s_lstm = 1.0 / jnp.sqrt(H)

    # PyTorch stores W_ih (4H, D); we store transposed (D, 4H). Biases b_ih+b_hh folded.
    params = {
        "wx1": u(ks[0], (input_dim, 4 * H), s_lstm),
        "wh1": u(ks[1], (H, 4 * H), s_lstm),
        "b1":  u(ks[2], (1, 4 * H), s_lstm) + u(ks[3], (1, 4 * H), s_lstm),
        "wx2": u(ks[4], (H, 4 * H), s_lstm),
        "wh2": u(ks[5], (H, 4 * H), s_lstm),
        "b2":  u(ks[6], (1, 4 * H), s_lstm) + u(ks[7], (1, 4 * H), s_lstm),
        "w11": u(ks[8], (H, H2), 1.0 / jnp.sqrt(H)),
        "b11": u(ks[9], (1, H2), 1.0 / jnp.sqrt(H)),
        "w12": u(ks[10], (H2, target_size), 1.0 / jnp.sqrt(H2)),
        "b12": u(ks[11], (1, target_size), 1.0 / jnp.sqrt(H2)),
        "w21": u(ks[12], (H, H2), 1.0 / jnp.sqrt(H)),
        "b21": u(ks[13], (1, H2), 1.0 / jnp.sqrt(H)),
    }
    k2 = jax.random.split(jax.random.fold_in(key, 1), 2)
    params["w22"] = u(k2[0], (H2, target_size), 1.0 / jnp.sqrt(H2))
    params["b22"] = u(k2[1], (1, target_size), 1.0 / jnp.sqrt(H2))
    return params


def reference_forward(column, params):
    """Pure-JAX f32 reference (PyTorch LSTM semantics) for verification."""
    B, T, D = column.shape
    H = params["wh1"].shape[0]

    def cell(xt, h, c, wx, wh, b):
        g = xt @ wx + h @ wh + b
        i = jax.nn.sigmoid(g[:, 0 * H:1 * H])
        f = jax.nn.sigmoid(g[:, 1 * H:2 * H])
        gg = jnp.tanh(g[:, 2 * H:3 * H])
        o = jax.nn.sigmoid(g[:, 3 * H:4 * H])
        c = f * c + i * gg
        return o * jnp.tanh(c), c

    def step(carry, xt):
        h1, c1, h2, c2 = carry
        h1, c1 = cell(xt, h1, c1, params["wx1"], params["wh1"], params["b1"])
        h2, c2 = cell(h1, h2, c2, params["wx2"], params["wh2"], params["b2"])
        return (h1, c1, h2, c2), h2

    z = jnp.zeros((B, H), jnp.float32)
    _, ys = jax.lax.scan(step, (z, z, z, z), jnp.swapaxes(column, 0, 1))
    lstm_out = jnp.swapaxes(ys, 0, 1)                      # (B, T, H)
    o1 = jnp.maximum(lstm_out @ params["w11"] + params["b11"], 0.0) @ params["w12"] + params["b12"]
    o2 = jnp.maximum(lstm_out @ params["w21"] + params["b21"], 0.0) @ params["w22"] + params["b22"]
    return jnp.stack([o1, o2], axis=1)                     # (B, 2, T, TG)


if __name__ == "__main__":
    B, T = 2, 8
    INPUT_DIM, HIDDEN_DIM, TARGET_SIZE = 16, 32, 4

    key = jax.random.PRNGKey(0)
    k_x, k_p = jax.random.split(key)
    column = jax.random.normal(k_x, (B, T, INPUT_DIM), jnp.float32)
    params = init_params(k_p, INPUT_DIM, HIDDEN_DIM, TARGET_SIZE)

    fwd = jax.jit(lstm_decomposer_forward)
    out = fwd(column, params)
    jax.block_until_ready(out)

    ref = reference_forward(column, params)
    assert out.shape == (B, 2, T, TARGET_SIZE), out.shape
    # bf16 MXU operands (f32 accumulation / f32 state) vs. the f32 reference:
    # tolerance loosened per review (recurrence accumulates ~1e-2-level error).
    max_err = float(jnp.max(jnp.abs(out - ref)))
    assert jnp.allclose(out, ref, atol=5e-2, rtol=5e-2), max_err

    print("KERNEL_OK")
</pallas_src>

<mosaic_0001>
module attributes {stable_mosaic.version = 11 : i64} {
  func.func @_lstm_decomposer_kernel(%arg0: memref<16x16xbf16, #tpu.memory_space<vmem>>, %arg1: memref<16x128xbf16, #tpu.memory_space<vmem>>, %arg2: memref<32x128xbf16, #tpu.memory_space<vmem>>, %arg3: memref<1x128xf32, #tpu.memory_space<vmem>>, %arg4: memref<32x128xbf16, #tpu.memory_space<vmem>>, %arg5: memref<32x128xbf16, #tpu.memory_space<vmem>>, %arg6: memref<1x128xf32, #tpu.memory_space<vmem>>, %arg7: memref<32x32xbf16, #tpu.memory_space<vmem>>, %arg8: memref<1x32xf32, #tpu.memory_space<vmem>>, %arg9: memref<32x128xbf16, #tpu.memory_space<vmem>>, %arg10: memref<1x128xf32, #tpu.memory_space<vmem>>, %arg11: memref<16x128xf32, #tpu.memory_space<vmem>>, %arg12: memref<16x32xf32, #tpu.memory_space<vmem>>, %arg13: memref<16x32xf32, #tpu.memory_space<vmem>>) attributes {dimension_semantics = [], scalar_prefetch = 0 : i64, scratch_operands = 2 : i64, tpu.core_type = #tpu.core_type<tc>} {
    %c0 = arith.constant 0 : index
    %c0_0 = arith.constant 0 : index
    %0 = vector.load %arg2[%c0, %c0_0] : memref<32x128xbf16, #tpu.memory_space<vmem>>, vector<32x128xbf16>
    %c0_1 = arith.constant 0 : index
    %c0_2 = arith.constant 0 : index
    %1 = vector.load %arg5[%c0_1, %c0_2] : memref<32x128xbf16, #tpu.memory_space<vmem>>, vector<32x128xbf16>
    %cst = arith.constant 0.000000e+00 : f32
    %2 = vector.broadcast %cst : f32 to vector<2x32xf32>
    %c0_3 = arith.constant 0 : index
    %c0_4 = arith.constant 0 : index
    %3 = vector.load %arg0[%c0_3, %c0_4] : memref<16x16xbf16, #tpu.memory_space<vmem>>, vector<16x16xbf16>
    %c0_5 = arith.constant 0 : index
    %c0_6 = arith.constant 0 : index
    %4 = vector.load %arg1[%c0_5, %c0_6] : memref<16x128xbf16, #tpu.memory_space<vmem>>, vector<16x128xbf16>
    %cst_7 = arith.constant dense<0.000000e+00> : vector<16x128xf32>
    %5 = tpu.matmul %3, %4, %cst_7 {dimension_numbers = #tpu.dot_dimension_numbers<[1], [0], [0], [1], [0, 0, 1, 1], [], []>} : vector<16x16xbf16>, vector<16x128xbf16>, vector<16x128xf32> -> vector<16x128xf32>
    %c0_8 = arith.constant 0 : index
    %c0_9 = arith.constant 0 : index
    %6 = vector.load %arg3[%c0_8, %c0_9] : memref<1x128xf32, #tpu.memory_space<vmem>>, vector<1x128xf32>
    %7 = vector.broadcast %6 : vector<1x128xf32> to vector<16x128xf32>
    %8 = arith.addf %5, %7 : vector<16x128xf32>
    %9 = vector.extract_strided_slice %8 {offsets = [0, 0], sizes = [2, 128], strides = [1, 1]} : vector<16x128xf32> to vector<2x128xf32>
    %10 = arith.truncf %2 : vector<2x32xf32> to vector<2x32xbf16>
    %cst_10 = arith.constant dense<0.000000e+00> : vector<2x128xf32>
    %11 = tpu.matmul %10, %0, %cst_10 {dimension_numbers = #tpu.dot_dimension_numbers<[1], [0], [0], [1], [0, 0, 1, 1], [], []>} : vector<2x32xbf16>, vector<32x128xbf16>, vector<2x128xf32> -> vector<2x128xf32>
    %12 = arith.addf %9, %11 : vector<2x128xf32>
    %13 = arith.negf %12 : vector<2x128xf32>
    %14 = math.exp %13 : vector<2x128xf32>
    %cst_11 = arith.constant 1.000000e+00 : f32
    %15 = vector.broadcast %cst_11 : f32 to vector<2x128xf32>
    %16 = arith.addf %15, %14 : vector<2x128xf32>
    %17 = arith.divf %15, %16 : vector<2x128xf32>
    %18 = math.tanh %12 : vector<2x128xf32>
    %19 = vector.extract_strided_slice %17 {offsets = [0, 0], sizes = [2, 32], strides = [1, 1]} : vector<2x128xf32> to vector<2x32xf32>
    %20 = vector.extract_strided_slice %17 {offsets = [0, 32], sizes = [2, 32], strides = [1, 1]} : vector<2x128xf32> to vector<2x32xf32>
    %21 = vector.extract_strided_slice %18 {offsets = [0, 64], sizes = [2, 32], strides = [1, 1]} : vector<2x128xf32> to vector<2x32xf32>
    %22 = vector.extract_strided_slice %17 {offsets = [0, 96], sizes = [2, 32], strides = [1, 1]} : vector<2x128xf32> to vector<2x32xf32>
    %23 = arith.mulf %20, %2 : vector<2x32xf32>
    %24 = arith.mulf %19, %21 : vector<2x32xf32>
    %25 = arith.addf %23, %24 : vector<2x32xf32>
    %26 = math.tanh %25 : vector<2x32xf32>
    %27 = arith.mulf %22, %26 : vector<2x32xf32>
    %c0_12 = arith.constant 0 : index
    %c0_13 = arith.constant 0 : index
    %28 = vector.load %arg12[%c0_12, %c0_13] : memref<16x32xf32, #tpu.memory_space<vmem>>, vector<2x32xf32>
    tpu.vector_store %arg12[%c0_12, %c0_13], %27 {strides = array<i32>} : memref<16x32xf32, #tpu.memory_space<vmem>>, vector<2x32xf32>,
    %29 = vector.extract_strided_slice %8 {offsets = [2, 0], sizes = [2, 128], strides = [1, 1]} : vector<16x128xf32> to vector<2x128xf32>
    %30 = arith.truncf %27 : vector<2x32xf32> to vector<2x32xbf16>
    %cst_14 = arith.constant dense<0.000000e+00> : vector<2x128xf32>
    %31 = tpu.matmul %30, %0, %cst_14 {dimension_numbers = #tpu.dot_dimension_numbers<[1], [0], [0], [1], [0, 0, 1, 1], [], []>} : vector<2x32xbf16>, vector<32x128xbf16>, vector<2x128xf32> -> vector<2x128xf32>
    %32 = arith.addf %29, %31 : vector<2x128xf32>
    %33 = arith.negf %32 : vector<2x128xf32>
    %34 = math.exp %33 : vector<2x128xf32>
    %cst_15 = arith.constant 1.000000e+00 : f32
    %35 = vector.broadcast %cst_15 : f32 to vector<2x128xf32>
    %36 = arith.addf %35, %34 : vector<2x128xf32>
    %37 = arith.divf %35, %36 : vector<2x128xf32>
    %38 = math.tanh %32 : vector<2x128xf32>
    %39 = vector.extract_strided_slice %37 {offsets = [0, 0], sizes = [2, 32], strides = [1, 1]} : vector<2x128xf32> to vector<2x32xf32>
    %40 = vector.extract_strided_slice %37 {offsets = [0, 32], sizes = [2, 32], strides = [1, 1]} : vector<2x128xf32> to vector<2x32xf32>
    %41 = vector.extract_strided_slice %38 {offsets = [0, 64], sizes = [2, 32], strides = [1, 1]} : vector<2x128xf32> to vector<2x32xf32>
    %42 = vector.extract_strided_slice %37 {offsets = [0, 96], sizes = [2, 32], strides = [1, 1]} : vector<2x128xf32> to vector<2x32xf32>
    %43 = arith.mulf %40, %25 : vector<2x32xf32>
    %44 = arith.mulf %39, %41 : vector<2x32xf32>
    %45 = arith.addf %43, %44 : vector<2x32xf32>
    %46 = math.tanh %45 : vector<2x32xf32>
    %47 = arith.mulf %42, %46 : vector<2x32xf32>
    %c2 = arith.constant 2 : index
    %c0_16 = arith.constant 0 : index
    %48 = vector.load %arg12[%c2, %c0_16] : memref<16x32xf32, #tpu.memory_space<vmem>>, vector<2x32xf32>
    tpu.vector_store %arg12[%c2, %c0_16], %47 {strides = array<i32>} : memref<16x32xf32, #tpu.memory_space<vmem>>, vector<2x32xf32>,
    %49 = vector.extract_strided_slice %8 {offsets = [4, 0], sizes = [2, 128], strides = [1, 1]} : vector<16x128xf32> to vector<2x128xf32>
    %50 = arith.truncf %47 : vector<2x32xf32> to vector<2x32xbf16>
    %cst_17 = arith.constant dense<0.000000e+00> : vector<2x128xf32>
    %51 = tpu.matmul %50, %0, %cst_17 {dimension_numbers = #tpu.dot_dimension_numbers<[1], [0], [0], [1], [0, 0, 1, 1], [], []>} : vector<2x32xbf16>, vector<32x128xbf16>, vector<2x128xf32> -> vector<2x128xf32>
    %52 = arith.addf %49, %51 : vector<2x128xf32>
    %53 = arith.negf %52 : vector<2x128xf32>
    %54 = math.exp %53 : vector<2x128xf32>
    %cst_18 = arith.constant 1.000000e+00 : f32
    %55 = vector.broadcast %cst_18 : f32 to vector<2x128xf32>
    %56 = arith.addf %55, %54 : vector<2x128xf32>
    %57 = arith.divf %55, %56 : vector<2x128xf32>
    %58 = math.tanh %52 : vector<2x128xf32>
    %59 = vector.extract_strided_slice %57 {offsets = [0, 0], sizes = [2, 32], strides = [1, 1]} : vector<2x128xf32> to vector<2x32xf32>
    %60 = vector.extract_strided_slice %57 {offsets = [0, 32], sizes = [2, 32], strides = [1, 1]} : vector<2x128xf32> to vector<2x32xf32>
    %61 = vector.extract_strided_slice %58 {offsets = [0, 64], sizes = [2, 32], strides = [1, 1]} : vector<2x128xf32> to vector<2x32xf32>
    %62 = vector.extract_strided_slice %57 {offsets = [0, 96], sizes = [2, 32], strides = [1, 1]} : vector<2x128xf32> to vector<2x32xf32>
    %63 = arith.mulf %60, %45 : vector<2x32xf32>
    %64 = arith.mulf %59, %61 : vector<2x32xf32>
    %65 = arith.addf %63, %64 : vector<2x32xf32>
    %66 = math.tanh %65 : vector<2x32xf32>
    %67 = arith.mulf %62, %66 : vector<2x32xf32>
    %c4 = arith.constant 4 : index
    %c0_19 = arith.constant 0 : index
    %68 = vector.load %arg12[%c4, %c0_19] : memref<16x32xf32, #tpu.memory_space<vmem>>, vector<2x32xf32>
    tpu.vector_store %arg12[%c4, %c0_19], %67 {strides = array<i32>} : memref<16x32xf32, #tpu.memory_space<vmem>>, vector<2x32xf32>,
    %69 = vector.extract_strided_slice %8 {offsets = [6, 0], sizes = [2, 128], strides = [1, 1]} : vector<16x128xf32> to vector<2x128xf32>
    %70 = arith.truncf %67 : vector<2x32xf32> to vector<2x32xbf16>
    %cst_20 = arith.constant dense<0.000000e+00> : vector<2x128xf32>
    %71 = tpu.matmul %70, %0, %cst_20 {dimension_numbers = #tpu.dot_dimension_numbers<[1], [0], [0], [1], [0, 0, 1, 1], [], []>} : vector<2x32xbf16>, vector<32x128xbf16>, vector<2x128xf32> -> vector<2x128xf32>
    %72 = arith.addf %69, %71 : vector<2x128xf32>
    %73 = arith.negf %72 : vector<2x128xf32>
    %74 = math.exp %73 : vector<2x128xf32>
    %cst_21 = arith.constant 1.000000e+00 : f32
    %75 = vector.broadcast %cst_21 : f32 to vector<2x128xf32>
    %76 = arith.addf %75, %74 : vector<2x128xf32>
    %77 = arith.divf %75, %76 : vector<2x128xf32>
    %78 = math.tanh %72 : vector<2x128xf32>
    %79 = vector.extract_strided_slice %77 {offsets = [0, 0], sizes = [2, 32], strides = [1, 1]} : vector<2x128xf32> to vector<2x32xf32>
    %80 = vector.extract_strided_slice %77 {offsets = [0, 32], sizes = [2, 32], strides = [1, 1]} : vector<2x128xf32> to vector<2x32xf32>
    %81 = vector.extract_strided_slice %78 {offsets = [0, 64], sizes = [2, 32], strides = [1, 1]} : vector<2x128xf32> to vector<2x32xf32>
    %82 = vector.extract_strided_slice %77 {offsets = [0, 96], sizes = [2, 32], strides = [1, 1]} : vector<2x128xf32> to vector<2x32xf32>
    %83 = arith.mulf %80, %65 : vector<2x32xf32>
    %84 = arith.mulf %79, %81 : vector<2x32xf32>
    %85 = arith.addf %83, %84 : vector<2x32xf32>
    %86 = math.tanh %85 : vector<2x32xf32>
    %87 = arith.mulf %82, %86 : vector<2x32xf32>
    %c6 = arith.constant 6 : index
    %c0_22 = arith.constant 0 : index
    %88 = vector.load %arg12[%c6, %c0_22] : memref<16x32xf32, #tpu.memory_space<vmem>>, vector<2x32xf32>
    tpu.vector_store %arg12[%c6, %c0_22], %87 {strides = array<i32>} : memref<16x32xf32, #tpu.memory_space<vmem>>, vector<2x32xf32>,
    %89 = vector.extract_strided_slice %8 {offsets = [8, 0], sizes = [2, 128], strides = [1, 1]} : vector<16x128xf32> to vector<2x128xf32>
    %90 = arith.truncf %87 : vector<2x32xf32> to vector<2x32xbf16>
    %cst_23 = arith.constant dense<0.000000e+00> : vector<2x128xf32>
    %91 = tpu.matmul %90, %0, %cst_23 {dimension_numbers = #tpu.dot_dimension_numbers<[1], [0], [0], [1], [0, 0, 1, 1], [], []>} : vector<2x32xbf16>, vector<32x128xbf16>, vector<2x128xf32> -> vector<2x128xf32>
    %92 = arith.addf %89, %91 : vector<2x128xf32>
    %93 = arith.negf %92 : vector<2x128xf32>
    %94 = math.exp %93 : vector<2x128xf32>
    %cst_24 = arith.constant 1.000000e+00 : f32
    %95 = vector.broadcast %cst_24 : f32 to vector<2x128xf32>
    %96 = arith.addf %95, %94 : vector<2x128xf32>
    %97 = arith.divf %95, %96 : vector<2x128xf32>
    %98 = math.tanh %92 : vector<2x128xf32>
    %99 = vector.extract_strided_slice %97 {offsets = [0, 0], sizes = [2, 32], strides = [1, 1]} : vector<2x128xf32> to vector<2x32xf32>
    %100 = vector.extract_strided_slice %97 {offsets = [0, 32], sizes = [2, 32], strides = [1, 1]} : vector<2x128xf32> to vector<2x32xf32>
    %101 = vector.extract_strided_slice %98 {offsets = [0, 64], sizes = [2, 32], strides = [1, 1]} : vector<2x128xf32> to vector<2x32xf32>
    %102 = vector.extract_strided_slice %97 {offsets = [0, 96], sizes = [2, 32], strides = [1, 1]} : vector<2x128xf32> to vector<2x32xf32>
    %103 = arith.mulf %100, %85 : vector<2x32xf32>
    %104 = arith.mulf %99, %101 : vector<2x32xf32>
    %105 = arith.addf %103, %104 : vector<2x32xf32>
    %106 = math.tanh %105 : vector<2x32xf32>
    %107 = arith.mulf %102, %106 : vector<2x32xf32>
    %c8 = arith.constant 8 : index
    %c0_25 = arith.constant 0 : index
    %108 = vector.load %arg12[%c8, %c0_25] : memref<16x32xf32, #tpu.memory_space<vmem>>, vector<2x32xf32>
    tpu.vector_store %arg12[%c8, %c0_25], %107 {strides = array<i32>} : memref<16x32xf32, #tpu.memory_space<vmem>>, vector<2x32xf32>,
    %109 = vector.extract_strided_slice %8 {offsets = [10, 0], sizes = [2, 128], strides = [1, 1]} : vector<16x128xf32> to vector<2x128xf32>
    %110 = arith.truncf %107 : vector<2x32xf32> to vector<2x32xbf16>
    %cst_26 = arith.constant dense<0.000000e+00> : vector<2x128xf32>
    %111 = tpu.matmul %110, %0, %cst_26 {dimension_numbers = #tpu.dot_dimension_numbers<[1], [0], [0], [1], [0, 0, 1, 1], [], []>} : vector<2x32xbf16>, vector<32x128xbf16>, vector<2x128xf32> -> vector<2x128xf32>
    %112 = arith.addf %109, %111 : vector<2x128xf32>
    %113 = arith.negf %112 : vector<2x128xf32>
    %114 = math.exp %113 : vector<2x128xf32>
    %cst_27 = arith.constant 1.000000e+00 : f32
    %115 = vector.broadcast %cst_27 : f32 to vector<2x128xf32>
    %116 = arith.addf %115, %114 : vector<2x128xf32>
    %117 = arith.divf %115, %116 : vector<2x128xf32>
    %118 = math.tanh %112 : vector<2x128xf32>
    %119 = vector.extract_strided_slice %117 {offsets = [0, 0], sizes = [2, 32], strides = [1, 1]} : vector<2x128xf32> to vector<2x32xf32>
    %120 = vector.extract_strided_slice %117 {offsets = [0, 32], sizes = [2, 32], strides = [1, 1]} : vector<2x128xf32> to vector<2x32xf32>
    %121 = vector.extract_strided_slice %118 {offsets = [0, 64], sizes = [2, 32], strides = [1, 1]} : vector<2x128xf32> to vector<2x32xf32>
    %122 = vector.extract_strided_slice %117 {offsets = [0, 96], sizes = [2, 32], strides = [1, 1]} : vector<2x128xf32> to vector<2x32xf32>
    %123 = arith.mulf %120, %105 : vector<2x32xf32>
    %124 = arith.mulf %119, %121 : vector<2x32xf32>
    %125 = arith.addf %123, %124 : vector<2x32xf32>
    %126 = math.tanh %125 : vector<2x32xf32>
    %127 = arith.mulf %122, %126 : vector<2x32xf32>
    %c10 = arith.constant 10 : index
    %c0_28 = arith.constant 0 : index
    %128 = vector.load %arg12[%c10, %c0_28] : memref<16x32xf32, #tpu.memory_space<vmem>>, vector<2x32xf32>
    tpu.vector_store %arg12[%c10, %c0_28], %127 {strides = array<i32>} : memref<16x32xf32, #tpu.memory_space<vmem>>, vector<2x32xf32>,
    %129 = vector.extract_strided_slice %8 {offsets = [12, 0], sizes = [2, 128], strides = [1, 1]} : vector<16x128xf32> to vector<2x128xf32>
    %130 = arith.truncf %127 : vector<2x32xf32> to vector<2x32xbf16>
    %cst_29 = arith.constant dense<0.000000e+00> : vector<2x128xf32>
    %131 = tpu.matmul %130, %0, %cst_29 {dimension_numbers = #tpu.dot_dimension_numbers<[1], [0], [0], [1], [0, 0, 1, 1], [], []>} : vector<2x32xbf16>, vector<32x128xbf16>, vector<2x128xf32> -> vector<2x128xf32>
    %132 = arith.addf %129, %131 : vector<2x128xf32>
    %133 = arith.negf %132 : vector<2x128xf32>
    %134 = math.exp %133 : vector<2x128xf32>
    %cst_30 = arith.constant 1.000000e+00 : f32
    %135 = vector.broadcast %cst_30 : f32 to vector<2x128xf32>
    %136 = arith.addf %135, %134 : vector<2x128xf32>
    %137 = arith.divf %135, %136 : vector<2x128xf32>
    %138 = math.tanh %132 : vector<2x128xf32>
    %139 = vector.extract_strided_slice %137 {offsets = [0, 0], sizes = [2, 32], strides = [1, 1]} : vector<2x128xf32> to vector<2x32xf32>
    %140 = vector.extract_strided_slice %137 {offsets = [0, 32], sizes = [2, 32], strides = [1, 1]} : vector<2x128xf32> to vector<2x32xf32>
    %141 = vector.extract_strided_slice %138 {offsets = [0, 64], sizes = [2, 32], strides = [1, 1]} : vector<2x128xf32> to vector<2x32xf32>
    %142 = vector.extract_strided_slice %137 {offsets = [0, 96], sizes = [2, 32], strides = [1, 1]} : vector<2x128xf32> to vector<2x32xf32>
    %143 = arith.mulf %140, %125 : vector<2x32xf32>
    %144 = arith.mulf %139, %141 : vector<2x32xf32>
    %145 = arith.addf %143, %144 : vector<2x32xf32>
    %146 = math.tanh %145 : vector<2x32xf32>
    %147 = arith.mulf %142, %146 : vector<2x32xf32>
    %c12 = arith.constant 12 : index
    %c0_31 = arith.constant 0 : index
    %148 = vector.load %arg12[%c12, %c0_31] : memref<16x32xf32, #tpu.memory_space<vmem>>, vector<2x32xf32>
    tpu.vector_store %arg12[%c12, %c0_31], %147 {strides = array<i32>} : memref<16x32xf32, #tpu.memory_space<vmem>>, vector<2x32xf32>,
    %149 = vector.extract_strided_slice %8 {offsets = [14, 0], sizes = [2, 128], strides = [1, 1]} : vector<16x128xf32> to vector<2x128xf32>
    %150 = arith.truncf %147 : vector<2x32xf32> to vector<2x32xbf16>
    %cst_32 = arith.constant dense<0.000000e+00> : vector<2x128xf32>
    %151 = tpu.matmul %150, %0, %cst_32 {dimension_numbers = #tpu.dot_dimension_numbers<[1], [0], [0], [1], [0, 0, 1, 1], [], []>} : vector<2x32xbf16>, vector<32x128xbf16>, vector<2x128xf32> -> vector<2x128xf32>
    %152 = arith.addf %149, %151 : vector<2x128xf32>
    %153 = arith.negf %152 : vector<2x128xf32>
    %154 = math.exp %153 : vector<2x128xf32>
    %cst_33 = arith.constant 1.000000e+00 : f32
    %155 = vector.broadcast %cst_33 : f32 to vector<2x128xf32>
    %156 = arith.addf %155, %154 : vector<2x128xf32>
    %157 = arith.divf %155, %156 : vector<2x128xf32>
    %158 = math.tanh %152 : vector<2x128xf32>
    %159 = vector.extract_strided_slice %157 {offsets = [0, 0], sizes = [2, 32], strides = [1, 1]} : vector<2x128xf32> to vector<2x32xf32>
    %160 = vector.extract_strided_slice %157 {offsets = [0, 32], sizes = [2, 32], strides = [1, 1]} : vector<2x128xf32> to vector<2x32xf32>
    %161 = vector.extract_strided_slice %158 {offsets = [0, 64], sizes = [2, 32], strides = [1, 1]} : vector<2x128xf32> to vector<2x32xf32>
    %162 = vector.extract_strided_slice %157 {offsets = [0, 96], sizes = [2, 32], strides = [1, 1]} : vector<2x128xf32> to vector<2x32xf32>
    %163 = arith.mulf %160, %145 : vector<2x32xf32>
    %164 = arith.mulf %159, %161 : vector<2x32xf32>
    %165 = arith.addf %163, %164 : vector<2x32xf32>
    %166 = math.tanh %165 : vector<2x32xf32>
    %167 = arith.mulf %162, %166 : vector<2x32xf32>
    %c14 = arith.constant 14 : index
    %c0_34 = arith.constant 0 : index
    %168 = vector.load %arg12[%c14, %c0_34] : memref<16x32xf32, #tpu.memory_space<vmem>>, vector<2x32xf32>
    tpu.vector_store %arg12[%c14, %c0_34], %167 {strides = array<i32>} : memref<16x32xf32, #tpu.memory_space<vmem>>, vector<2x32xf32>,
    %c0_35 = arith.constant 0 : index
    %c0_36 = arith.constant 0 : index
    %169 = vector.load %arg12[%c0_35, %c0_36] : memref<16x32xf32, #tpu.memory_space<vmem>>, vector<16x32xf32>
    %170 = arith.truncf %169 : vector<16x32xf32> to vector<16x32xbf16>
    %c0_37 = arith.constant 0 : index
    %c0_38 = arith.constant 0 : index
    %171 = vector.load %arg4[%c0_37, %c0_38] : memref<32x128xbf16, #tpu.memory_space<vmem>>, vector<32x128xbf16>
    %cst_39 = arith.constant dense<0.000000e+00> : vector<16x128xf32>
    %172 = tpu.matmul %170, %171, %cst_39 {dimension_numbers = #tpu.dot_dimension_numbers<[1], [0], [0], [1], [0, 0, 1, 1], [], []>} : vector<16x32xbf16>, vector<32x128xbf16>, vector<16x128xf32> -> vector<16x128xf32>
    %c0_40 = arith.constant 0 : index
    %c0_41 = arith.constant 0 : index
    %173 = vector.load %arg6[%c0_40, %c0_41] : memref<1x128xf32, #tpu.memory_space<vmem>>, vector<1x128xf32>
    %174 = vector.broadcast %173 : vector<1x128xf32> to vector<16x128xf32>
    %175 = arith.addf %172, %174 : vector<16x128xf32>
    %176 = vector.extract_strided_slice %175 {offsets = [0, 0], sizes = [2, 128], strides = [1, 1]} : vector<16x128xf32> to vector<2x128xf32>
    %177 = arith.truncf %2 : vector<2x32xf32> to vector<2x32xbf16>
    %cst_42 = arith.constant dense<0.000000e+00> : vector<2x128xf32>
    %178 = tpu.matmul %177, %1, %cst_42 {dimension_numbers = #tpu.dot_dimension_numbers<[1], [0], [0], [1], [0, 0, 1, 1], [], []>} : vector<2x32xbf16>, vector<32x128xbf16>, vector<2x128xf32> -> vector<2x128xf32>
    %179 = arith.addf %176, %178 : vector<2x128xf32>
    %180 = arith.negf %179 : vector<2x128xf32>
    %181 = math.exp %180 : vector<2x128xf32>
    %cst_43 = arith.constant 1.000000e+00 : f32
    %182 = vector.broadcast %cst_43 : f32 to vector<2x128xf32>
    %183 = arith.addf %182, %181 : vector<2x128xf32>
    %184 = arith.divf %182, %183 : vector<2x128xf32>
    %185 = math.tanh %179 : vector<2x128xf32>
    %186 = vector.extract_strided_slice %184 {offsets = [0, 0], sizes = [2, 32], strides = [1, 1]} : vector<2x128xf32> to vector<2x32xf32>
    %187 = vector.extract_strided_slice %184 {offsets = [0, 32], sizes = [2, 32], strides = [1, 1]} : vector<2x128xf32> to vector<2x32xf32>
    %188 = vector.extract_strided_slice %185 {offsets = [0, 64], sizes = [2, 32], strides = [1, 1]} : vector<2x128xf32> to vector<2x32xf32>
    %189 = vector.extract_strided_slice %184 {offsets = [0, 96], sizes = [2, 32], strides = [1, 1]} : vector<2x128xf32> to vector<2x32xf32>
    %190 = arith.mulf %187, %2 : vector<2x32xf32>
    %191 = arith.mulf %186, %188 : vector<2x32xf32>
    %192 = arith.addf %190, %191 : vector<2x32xf32>
    %193 = math.tanh %192 : vector<2x32xf32>
    %194 = arith.mulf %189, %193 : vector<2x32xf32>
    %c0_44 = arith.constant 0 : index
    %c0_45 = arith.constant 0 : index
    %195 = vector.load %arg13[%c0_44, %c0_45] : memref<16x32xf32, #tpu.memory_space<vmem>>, vector<2x32xf32>
    tpu.vector_store %arg13[%c0_44, %c0_45], %194 {strides = array<i32>} : memref<16x32xf32, #tpu.memory_space<vmem>>, vector<2x32xf32>,
    %196 = vector.extract_strided_slice %175 {offsets = [2, 0], sizes = [2, 128], strides = [1, 1]} : vector<16x128xf32> to vector<2x128xf32>
    %197 = arith.truncf %194 : vector<2x32xf32> to vector<2x32xbf16>
    %cst_46 = arith.constant dense<0.000000e+00> : vector<2x128xf32>
    %198 = tpu.matmul %197, %1, %cst_46 {dimension_numbers = #tpu.dot_dimension_numbers<[1], [0], [0], [1], [0, 0, 1, 1], [], []>} : vector<2x32xbf16>, vector<32x128xbf16>, vector<2x128xf32> -> vector<2x128xf32>
    %199 = arith.addf %196, %198 : vector<2x128xf32>
    %200 = arith.negf %199 : vector<2x128xf32>
    %201 = math.exp %200 : vector<2x128xf32>
    %cst_47 = arith.constant 1.000000e+00 : f32
    %202 = vector.broadcast %cst_47 : f32 to vector<2x128xf32>
    %203 = arith.addf %202, %201 : vector<2x128xf32>
    %204 = arith.divf %202, %203 : vector<2x128xf32>
    %205 = math.tanh %199 : vector<2x128xf32>
    %206 = vector.extract_strided_slice %204 {offsets = [0, 0], sizes = [2, 32], strides = [1, 1]} : vector<2x128xf32> to vector<2x32xf32>
    %207 = vector.extract_strided_slice %204 {offsets = [0, 32], sizes = [2, 32], strides = [1, 1]} : vector<2x128xf32> to vector<2x32xf32>
    %208 = vector.extract_strided_slice %205 {offsets = [0, 64], sizes = [2, 32], strides = [1, 1]} : vector<2x128xf32> to vector<2x32xf32>
    %209 = vector.extract_strided_slice %204 {offsets = [0, 96], sizes = [2, 32], strides = [1, 1]} : vector<2x128xf32> to vector<2x32xf32>
    %210 = arith.mulf %207, %192 : vector<2x32xf32>
    %211 = arith.mulf %206, %208 : vector<2x32xf32>
    %212 = arith.addf %210, %211 : vector<2x32xf32>
    %213 = math.tanh %212 : vector<2x32xf32>
    %214 = arith.mulf %209, %213 : vector<2x32xf32>
    %c2_48 = arith.constant 2 : index
    %c0_49 = arith.constant 0 : index
    %215 = vector.load %arg13[%c2_48, %c0_49] : memref<16x32xf32, #tpu.memory_space<vmem>>, vector<2x32xf32>
    tpu.vector_store %arg13[%c2_48, %c0_49], %214 {strides = array<i32>} : memref<16x32xf32, #tpu.memory_space<vmem>>, vector<2x32xf32>,
    %216 = vector.extract_strided_slice %175 {offsets = [4, 0], sizes = [2, 128], strides = [1, 1]} : vector<16x128xf32> to vector<2x128xf32>
    %217 = arith.truncf %214 : vector<2x32xf32> to vector<2x32xbf16>
    %cst_50 = arith.constant dense<0.000000e+00> : vector<2x128xf32>
    %218 = tpu.matmul %217, %1, %cst_50 {dimension_numbers = #tpu.dot_dimension_numbers<[1], [0], [0], [1], [0, 0, 1, 1], [], []>} : vector<2x32xbf16>, vector<32x128xbf16>, vector<2x128xf32> -> vector<2x128xf32>
    %219 = arith.addf %216, %218 : vector<2x128xf32>
    %220 = arith.negf %219 : vector<2x128xf32>
    %221 = math.exp %220 : vector<2x128xf32>
    %cst_51 = arith.constant 1.000000e+00 : f32
    %222 = vector.broadcast %cst_51 : f32 to vector<2x128xf32>
    %223 = arith.addf %222, %221 : vector<2x128xf32>
    %224 = arith.divf %222, %223 : vector<2x128xf32>
    %225 = math.tanh %219 : vector<2x128xf32>
    %226 = vector.extract_strided_slice %224 {offsets = [0, 0], sizes = [2, 32], strides = [1, 1]} : vector<2x128xf32> to vector<2x32xf32>
    %227 = vector.extract_strided_slice %224 {offsets = [0, 32], sizes = [2, 32], strides = [1, 1]} : vector<2x128xf32> to vector<2x32xf32>
    %228 = vector.extract_strided_slice %225 {offsets = [0, 64], sizes = [2, 32], strides = [1, 1]} : vector<2x128xf32> to vector<2x32xf32>
    %229 = vector.extract_strided_slice %224 {offsets = [0, 96], sizes = [2, 32], strides = [1, 1]} : vector<2x128xf32> to vector<2x32xf32>
    %230 = arith.mulf %227, %212 : vector<2x32xf32>
    %231 = arith.mulf %226, %228 : vector<2x32xf32>
    %232 = arith.addf %230, %231 : vector<2x32xf32>
    %233 = math.tanh %232 : vector<2x32xf32>
    %234 = arith.mulf %229, %233 : vector<2x32xf32>
    %c4_52 = arith.constant 4 : index
    %c0_53 = arith.constant 0 : index
    %235 = vector.load %arg13[%c4_52, %c0_53] : memref<16x32xf32, #tpu.memory_space<vmem>>, vector<2x32xf32>
    tpu.vector_store %arg13[%c4_52, %c0_53], %234 {strides = array<i32>} : memref<16x32xf32, #tpu.memory_space<vmem>>, vector<2x32xf32>,
    %236 = vector.extract_strided_slice %175 {offsets = [6, 0], sizes = [2, 128], strides = [1, 1]} : vector<16x128xf32> to vector<2x128xf32>
    %237 = arith.truncf %234 : vector<2x32xf32> to vector<2x32xbf16>
    %cst_54 = arith.constant dense<0.000000e+00> : vector<2x128xf32>
    %238 = tpu.matmul %237, %1, %cst_54 {dimension_numbers = #tpu.dot_dimension_numbers<[1], [0], [0], [1], [0, 0, 1, 1], [], []>} : vector<2x32xbf16>, vector<32x128xbf16>, vector<2x128xf32> -> vector<2x128xf32>
    %239 = arith.addf %236, %238 : vector<2x128xf32>
    %240 = arith.negf %239 : vector<2x128xf32>
    %241 = math.exp %240 : vector<2x128xf32>
    %cst_55 = arith.constant 1.000000e+00 : f32
    %242 = vector.broadcast %cst_55 : f32 to vector<2x128xf32>
    %243 = arith.addf %242, %241 : vector<2x128xf32>
    %244 = arith.divf %242, %243 : vector<2x128xf32>
    %245 = math.tanh %239 : vector<2x128xf32>
    %246 = vector.extract_strided_slice %244 {offsets = [0, 0], sizes = [2, 32], strides = [1, 1]} : vector<2x128xf32> to vector<2x32xf32>
    %247 = vector.extract_strided_slice %244 {offsets = [0, 32], sizes = [2, 32], strides = [1, 1]} : vector<2x128xf32> to vector<2x32xf32>
    %248 = vector.extract_strided_slice %245 {offsets = [0, 64], sizes = [2, 32], strides = [1, 1]} : vector<2x128xf32> to vector<2x32xf32>
    %249 = vector.extract_strided_slice %244 {offsets = [0, 96], sizes = [2, 32], strides = [1, 1]} : vector<2x128xf32> to vector<2x32xf32>
    %250 = arith.mulf %247, %232 : vector<2x32xf32>
    %251 = arith.mulf %246, %248 : vector<2x32xf32>
    %252 = arith.addf %250, %251 : vector<2x32xf32>
    %253 = math.tanh %252 : vector<2x32xf32>
    %254 = arith.mulf %249, %253 : vector<2x32xf32>
    %c6_56 = arith.constant 6 : index
    %c0_57 = arith.constant 0 : index
    %255 = vector.load %arg13[%c6_56, %c0_57] : memref<16x32xf32, #tpu.memory_space<vmem>>, vector<2x32xf32>
    tpu.vector_store %arg13[%c6_56, %c0_57], %254 {strides = array<i32>} : memref<16x32xf32, #tpu.memory_space<vmem>>, vector<2x32xf32>,
    %256 = vector.extract_strided_slice %175 {offsets = [8, 0], sizes = [2, 128], strides = [1, 1]} : vector<16x128xf32> to vector<2x128xf32>
    %257 = arith.truncf %254 : vector<2x32xf32> to vector<2x32xbf16>
    %cst_58 = arith.constant dense<0.000000e+00> : vector<2x128xf32>
    %258 = tpu.matmul %257, %1, %cst_58 {dimension_numbers = #tpu.dot_dimension_numbers<[1], [0], [0], [1], [0, 0, 1, 1], [], []>} : vector<2x32xbf16>, vector<32x128xbf16>, vector<2x128xf32> -> vector<2x128xf32>
    %259 = arith.addf %256, %258 : vector<2x128xf32>
    %260 = arith.negf %259 : vector<2x128xf32>
    %261 = math.exp %260 : vector<2x128xf32>
    %cst_59 = arith.constant 1.000000e+00 : f32
    %262 = vector.broadcast %cst_59 : f32 to vector<2x128xf32>
    %263 = arith.addf %262, %261 : vector<2x128xf32>
    %264 = arith.divf %262, %263 : vector<2x128xf32>
    %265 = math.tanh %259 : vector<2x128xf32>
    %266 = vector.extract_strided_slice %264 {offsets = [0, 0], sizes = [2, 32], strides = [1, 1]} : vector<2x128xf32> to vector<2x32xf32>
    %267 = vector.extract_strided_slice %264 {offsets = [0, 32], sizes = [2, 32], strides = [1, 1]} : vector<2x128xf32> to vector<2x32xf32>
    %268 = vector.extract_strided_slice %265 {offsets = [0, 64], sizes = [2, 32], strides = [1, 1]} : vector<2x128xf32> to vector<2x32xf32>
    %269 = vector.extract_strided_slice %264 {offsets = [0, 96], sizes = [2, 32], strides = [1, 1]} : vector<2x128xf32> to vector<2x32xf32>
    %270 = arith.mulf %267, %252 : vector<2x32xf32>
    %271 = arith.mulf %266, %268 : vector<2x32xf32>
    %272 = arith.addf %270, %271 : vector<2x32xf32>
    %273 = math.tanh %272 : vector<2x32xf32>
    %274 = arith.mulf %269, %273 : vector<2x32xf32>
    %c8_60 = arith.constant 8 : index
    %c0_61 = arith.constant 0 : index
    %275 = vector.load %arg13[%c8_60, %c0_61] : memref<16x32xf32, #tpu.memory_space<vmem>>, vector<2x32xf32>
    tpu.vector_store %arg13[%c8_60, %c0_61], %274 {strides = array<i32>} : memref<16x32xf32, #tpu.memory_space<vmem>>, vector<2x32xf32>,
    %276 = vector.extract_strided_slice %175 {offsets = [10, 0], sizes = [2, 128], strides = [1, 1]} : vector<16x128xf32> to vector<2x128xf32>
    %277 = arith.truncf %274 : vector<2x32xf32> to vector<2x32xbf16>
    %cst_62 = arith.constant dense<0.000000e+00> : vector<2x128xf32>
    %278 = tpu.matmul %277, %1, %cst_62 {dimension_numbers = #tpu.dot_dimension_numbers<[1], [0], [0], [1], [0, 0, 1, 1], [], []>} : vector<2x32xbf16>, vector<32x128xbf16>, vector<2x128xf32> -> vector<2x128xf32>
    %279 = arith.addf %276, %278 : vector<2x128xf32>
    %280 = arith.negf %279 : vector<2x128xf32>
    %281 = math.exp %280 : vector<2x128xf32>
    %cst_63 = arith.constant 1.000000e+00 : f32
    %282 = vector.broadcast %cst_63 : f32 to vector<2x128xf32>
    %283 = arith.addf %282, %281 : vector<2x128xf32>
    %284 = arith.divf %282, %283 : vector<2x128xf32>
    %285 = math.tanh %279 : vector<2x128xf32>
    %286 = vector.extract_strided_slice %284 {offsets = [0, 0], sizes = [2, 32], strides = [1, 1]} : vector<2x128xf32> to vector<2x32xf32>
    %287 = vector.extract_strided_slice %284 {offsets = [0, 32], sizes = [2, 32], strides = [1, 1]} : vector<2x128xf32> to vector<2x32xf32>
    %288 = vector.extract_strided_slice %285 {offsets = [0, 64], sizes = [2, 32], strides = [1, 1]} : vector<2x128xf32> to vector<2x32xf32>
    %289 = vector.extract_strided_slice %284 {offsets = [0, 96], sizes = [2, 32], strides = [1, 1]} : vector<2x128xf32> to vector<2x32xf32>
    %290 = arith.mulf %287, %272 : vector<2x32xf32>
    %291 = arith.mulf %286, %288 : vector<2x32xf32>
    %292 = arith.addf %290, %291 : vector<2x32xf32>
    %293 = math.tanh %292 : vector<2x32xf32>
    %294 = arith.mulf %289, %293 : vector<2x32xf32>
    %c10_64 = arith.constant 10 : index
    %c0_65 = arith.constant 0 : index
    %295 = vector.load %arg13[%c10_64, %c0_65] : memref<16x32xf32, #tpu.memory_space<vmem>>, vector<2x32xf32>
    tpu.vector_store %arg13[%c10_64, %c0_65], %294 {strides = array<i32>} : memref<16x32xf32, #tpu.memory_space<vmem>>, vector<2x32xf32>,
    %296 = vector.extract_strided_slice %175 {offsets = [12, 0], sizes = [2, 128], strides = [1, 1]} : vector<16x128xf32> to vector<2x128xf32>
    %297 = arith.truncf %294 : vector<2x32xf32> to vector<2x32xbf16>
    %cst_66 = arith.constant dense<0.000000e+00> : vector<2x128xf32>
    %298 = tpu.matmul %297, %1, %cst_66 {dimension_numbers = #tpu.dot_dimension_numbers<[1], [0], [0], [1], [0, 0, 1, 1], [], []>} : vector<2x32xbf16>, vector<32x128xbf16>, vector<2x128xf32> -> vector<2x128xf32>
    %299 = arith.addf %296, %298 : vector<2x128xf32>
    %300 = arith.negf %299 : vector<2x128xf32>
    %301 = math.exp %300 : vector<2x128xf32>
    %cst_67 = arith.constant 1.000000e+00 : f32
    %302 = vector.broadcast %cst_67 : f32 to vector<2x128xf32>
    %303 = arith.addf %302, %301 : vector<2x128xf32>
    %304 = arith.divf %302, %303 : vector<2x128xf32>
    %305 = math.tanh %299 : vector<2x128xf32>
    %306 = vector.extract_strided_slice %304 {offsets = [0, 0], sizes = [2, 32], strides = [1, 1]} : vector<2x128xf32> to vector<2x32xf32>
    %307 = vector.extract_strided_slice %304 {offsets = [0, 32], sizes = [2, 32], strides = [1, 1]} : vector<2x128xf32> to vector<2x32xf32>
    %308 = vector.extract_strided_slice %305 {offsets = [0, 64], sizes = [2, 32], strides = [1, 1]} : vector<2x128xf32> to vector<2x32xf32>
    %309 = vector.extract_strided_slice %304 {offsets = [0, 96], sizes = [2, 32], strides = [1, 1]} : vector<2x128xf32> to vector<2x32xf32>
    %310 = arith.mulf %307, %292 : vector<2x32xf32>
    %311 = arith.mulf %306, %308 : vector<2x32xf32>
    %312 = arith.addf %310, %311 : vector<2x32xf32>
    %313 = math.tanh %312 : vector<2x32xf32>
    %314 = arith.mulf %309, %313 : vector<2x32xf32>
    %c12_68 = arith.constant 12 : index
    %c0_69 = arith.constant 0 : index
    %315 = vector.load %arg13[%c12_68, %c0_69] : memref<16x32xf32, #tpu.memory_space<vmem>>, vector<2x32xf32>
    tpu.vector_store %arg13[%c12_68, %c0_69], %314 {strides = array<i32>} : memref<16x32xf32, #tpu.memory_space<vmem>>, vector<2x32xf32>,
    %316 = vector.extract_strided_slice %175 {offsets = [14, 0], sizes = [2, 128], strides = [1, 1]} : vector<16x128xf32> to vector<2x128xf32>
    %317 = arith.truncf %314 : vector<2x32xf32> to vector<2x32xbf16>
    %cst_70 = arith.constant dense<0.000000e+00> : vector<2x128xf32>
    %318 = tpu.matmul %317, %1, %cst_70 {dimension_numbers = #tpu.dot_dimension_numbers<[1], [0], [0], [1], [0, 0, 1, 1], [], []>} : vector<2x32xbf16>, vector<32x128xbf16>, vector<2x128xf32> -> vector<2x128xf32>
    %319 = arith.addf %316, %318 : vector<2x128xf32>
    %320 = arith.negf %319 : vector<2x128xf32>
    %321 = math.exp %320 : vector<2x128xf32>
    %cst_71 = arith.constant 1.000000e+00 : f32
    %322 = vector.broadcast %cst_71 : f32 to vector<2x128xf32>
    %323 = arith.addf %322, %321 : vector<2x128xf32>
    %324 = arith.divf %322, %323 : vector<2x128xf32>
    %325 = math.tanh %319 : vector<2x128xf32>
    %326 = vector.extract_strided_slice %324 {offsets = [0, 0], sizes = [2, 32], strides = [1, 1]} : vector<2x128xf32> to vector<2x32xf32>
    %327 = vector.extract_strided_slice %324 {offsets = [0, 32], sizes = [2, 32], strides = [1, 1]} : vector<2x128xf32> to vector<2x32xf32>
    %328 = vector.extract_strided_slice %325 {offsets = [0, 64], sizes = [2, 32], strides = [1, 1]} : vector<2x128xf32> to vector<2x32xf32>
    %329 = vector.extract_strided_slice %324 {offsets = [0, 96], sizes = [2, 32], strides = [1, 1]} : vector<2x128xf32> to vector<2x32xf32>
    %330 = arith.mulf %327, %312 : vector<2x32xf32>
    %331 = arith.mulf %326, %328 : vector<2x32xf32>
    %332 = arith.addf %330, %331 : vector<2x32xf32>
    %333 = math.tanh %332 : vector<2x32xf32>
    %334 = arith.mulf %329, %333 : vector<2x32xf32>
    %c14_72 = arith.constant 14 : index
    %c0_73 = arith.constant 0 : index
    %335 = vector.load %arg13[%c14_72, %c0_73] : memref<16x32xf32, #tpu.memory_space<vmem>>, vector<2x32xf32>
    tpu.vector_store %arg13[%c14_72, %c0_73], %334 {strides = array<i32>} : memref<16x32xf32, #tpu.memory_space<vmem>>, vector<2x32xf32>,
    %c0_74 = arith.constant 0 : index
    %c0_75 = arith.constant 0 : index
    %336 = vector.load %arg13[%c0_74, %c0_75] : memref<16x32xf32, #tpu.memory_space<vmem>>, vector<16x32xf32>
    %337 = arith.truncf %336 : vector<16x32xf32> to vector<16x32xbf16>
    %c0_76 = arith.constant 0 : index
    %c0_77 = arith.constant 0 : index
    %338 = vector.load %arg7[%c0_76, %c0_77] : memref<32x32xbf16, #tpu.memory_space<vmem>>, vector<32x32xbf16>
    %cst_78 = arith.constant dense<0.000000e+00> : vector<16x32xf32>
    %339 = tpu.matmul %337, %338, %cst_78 {dimension_numbers = #tpu.dot_dimension_numbers<[1], [0], [0], [1], [0, 0, 1, 1], [], []>} : vector<16x32xbf16>, vector<32x32xbf16>, vector<16x32xf32> -> vector<16x32xf32>
    %c0_79 = arith.constant 0 : index
    %c0_80 = arith.constant 0 : index
    %340 = vector.load %arg8[%c0_79, %c0_80] : memref<1x32xf32, #tpu.memory_space<vmem>>, vector<1x32xf32>
    %341 = vector.broadcast %340 : vector<1x32xf32> to vector<16x32xf32>
    %342 = arith.addf %339, %341 : vector<16x32xf32>
    %cst_81 = arith.constant 0.000000e+00 : f32
    %343 = vector.broadcast %cst_81 : f32 to vector<16x32xf32>
    %344 = arith.maximumf %342, %343 : vector<16x32xf32>
    %345 = arith.truncf %344 : vector<16x32xf32> to vector<16x32xbf16>
    %c0_82 = arith.constant 0 : index
    %c0_83 = arith.constant 0 : index
    %346 = vector.load %arg9[%c0_82, %c0_83] : memref<32x128xbf16, #tpu.memory_space<vmem>>, vector<32x128xbf16>
    %cst_84 = arith.constant dense<0.000000e+00> : vector<16x128xf32>
    %347 = tpu.matmul %345, %346, %cst_84 {dimension_numbers = #tpu.dot_dimension_numbers<[1], [0], [0], [1], [0, 0, 1, 1], [], []>} : vector<16x32xbf16>, vector<32x128xbf16>, vector<16x128xf32> -> vector<16x128xf32>
    %c0_85 = arith.constant 0 : index
    %c0_86 = arith.constant 0 : index
    %348 = vector.load %arg10[%c0_85, %c0_86] : memref<1x128xf32, #tpu.memory_space<vmem>>, vector<1x128xf32>
    %349 = vector.broadcast %348 : vector<1x128xf32> to vector<16x128xf32>
    %350 = arith.addf %347, %349 : vector<16x128xf32>
    %c0_87 = arith.constant 0 : index
    %c0_88 = arith.constant 0 : index
    %351 = vector.load %arg11[%c0_87, %c0_88] : memref<16x128xf32, #tpu.memory_space<vmem>>, vector<16x128xf32>
    tpu.vector_store %arg11[%c0_87, %c0_88], %350 {strides = array<i32>} : memref<16x128xf32, #tpu.memory_space<vmem>>, vector<16x128xf32>,
    return
  }
}

</mosaic_0001>

<llo_original>
// kernel: lstm_decomposer_forward.1
$region0: #{lstm_decomposer_forward.1}
  #allocation0 [shape = 'u32[]', space=smem, size = 0x4, offset = 0x4, fixed_abs, tag = 'smem constant byte address 0x4 - core index']
  #allocation1 [shape = 'u32[144,128]{1,0:T(1,128)}', space=vmem, size = 0x12000, scoped, tag = 'internal scratch']
  #allocation2 [shape = 'f32[16,32]{1,0:T(8,128)}', space=vmem, size = 0x2000, scoped, tag = 'scratch operand']
  #allocation3 [shape = 'f32[16,32]{1,0:T(8,128)}', space=vmem, size = 0x2000, scoped, tag = 'scratch operand']
  %s0 = inlined_call_operand.vmem [shape: bf16[16,16], index: 0, kind: input, shape index: {}]
  %s1 = inlined_call_operand.vmem [shape: bf16[16,128], index: 1, kind: input, shape index: {}]
  %s2 = inlined_call_operand.vmem [shape: bf16[32,128], index: 2, kind: input, shape index: {}]
  %s3 = inlined_call_operand.vmem [shape: f32[1,128], index: 3, kind: input, shape index: {}]
  %s4 = inlined_call_operand.vmem [shape: bf16[32,128], index: 4, kind: input, shape index: {}]
  %s5 = inlined_call_operand.vmem [shape: bf16[32,128], index: 5, kind: input, shape index: {}]
  %s6 = inlined_call_operand.vmem [shape: f32[1,128], index: 6, kind: input, shape index: {}]
  %s7 = inlined_call_operand.vmem [shape: bf16[32,32], index: 7, kind: input, shape index: {}]
  %s8 = inlined_call_operand.vmem [shape: f32[1,32], index: 8, kind: input, shape index: {}]
  %s9 = inlined_call_operand.vmem [shape: bf16[32,128], index: 9, kind: input, shape index: {}]
  %s10 = inlined_call_operand.vmem [shape: f32[1,128], index: 10, kind: input, shape index: {}]
  %s11 = inlined_call_operand.vmem [shape: f32[16,128], index: 11, kind: output, shape index: {}]
  %s12 = sld [smem:[#allocation0]]
  $region54: #{lstm_decomposer_forward.1} parent=0
    _
  %s14 = ssub.s32 1, %s12
  %s15 = scalar_select 0, %s14, %s12
  // Predicated region
  $region2: #{lstm_decomposer_forward.1} parent=0 // pred_check
    _
  $region3: #{lstm_decomposer_forward.1} parent=0 // pred_check_branch
    %17 = sbr.rel (0) target = $region5
  $region4: #{lstm_decomposer_forward.1} parent=0 // pred_region
    _
  $region5: #{lstm_decomposer_forward.1} parent=0 // pred_fallthru
    _
  // Predicated region
  $region6: #{lstm_decomposer_forward.1} parent=0 // pred_check
    _
  $region7: #{lstm_decomposer_forward.1} parent=0 // pred_check_branch
    %19 = sbr.rel (0) target = $region9
  $region8: #{lstm_decomposer_forward.1} parent=0 // pred_region
    _
  $region9: #{lstm_decomposer_forward.1} parent=0 // pred_fallthru
    _
  // Predicated region
  $region10: #{lstm_decomposer_forward.1} parent=0 // pred_check
    _
  $region11: #{lstm_decomposer_forward.1} parent=0 // pred_check_branch
    %21 = sbr.rel (0) target = $region13
  $region12: #{lstm_decomposer_forward.1} parent=0 // pred_region
    _
  $region13: #{lstm_decomposer_forward.1} parent=0 // pred_fallthru
    _
  // Predicated region
  $region14: #{lstm_decomposer_forward.1} parent=0 // pred_check
    _
  $region15: #{lstm_decomposer_forward.1} parent=0 // pred_check_branch
    %23 = sbr.rel (0) target = $region17
  $region16: #{lstm_decomposer_forward.1} parent=0 // pred_region
    _
  $region17: #{lstm_decomposer_forward.1} parent=0 // pred_fallthru
    _
  // Predicated region
  $region18: #{lstm_decomposer_forward.1} parent=0 // pred_check
    _
  $region19: #{lstm_decomposer_forward.1} parent=0 // pred_check_branch
    %25 = sbr.rel (0) target = $region21
  $region20: #{lstm_decomposer_forward.1} parent=0 // pred_region
    _
  $region21: #{lstm_decomposer_forward.1} parent=0 // pred_fallthru
    _
  // Predicated region
  $region22: #{lstm_decomposer_forward.1} parent=0 // pred_check
    _
  $region23: #{lstm_decomposer_forward.1} parent=0 // pred_check_branch
    %27 = sbr.rel (0) target = $region25
  $region24: #{lstm_decomposer_forward.1} parent=0 // pred_region
    _
  $region25: #{lstm_decomposer_forward.1} parent=0 // pred_fallthru
    _
  // Predicated region
  $region26: #{lstm_decomposer_forward.1} parent=0 // pred_check
    _
  $region27: #{lstm_decomposer_forward.1} parent=0 // pred_check_branch
    %29 = sbr.rel (0) target = $region29
  $region28: #{lstm_decomposer_forward.1} parent=0 // pred_region
    _
  $region29: #{lstm_decomposer_forward.1} parent=0 // pred_fallthru
    _
  // Predicated region
  $region30: #{lstm_decomposer_forward.1} parent=0 // pred_check
    _
  $region31: #{lstm_decomposer_forward.1} parent=0 // pred_check_branch
    %31 = sbr.rel (0) target = $region33
  $region32: #{lstm_decomposer_forward.1} parent=0 // pred_region
    _
  $region33: #{lstm_decomposer_forward.1} parent=0 // pred_fallthru
    _
  // Predicated region
  $region34: #{lstm_decomposer_forward.1} parent=0 // pred_check
    _
  $region35: #{lstm_decomposer_forward.1} parent=0 // pred_check_branch
    %33 = sbr.rel (0) target = $region37
  $region36: #{lstm_decomposer_forward.1} parent=0 // pred_region
    _
  $region37: #{lstm_decomposer_forward.1} parent=0 // pred_fallthru
    _
  // Predicated region
  $region38: #{lstm_decomposer_forward.1} parent=0 // pred_check
    _
  $region39: #{lstm_decomposer_forward.1} parent=0 // pred_check_branch
    %35 = sbr.rel (0) target = $region41
  $region40: #{lstm_decomposer_forward.1} parent=0 // pred_region
    _
  $region41: #{lstm_decomposer_forward.1} parent=0 // pred_fallthru
    _
  // Predicated region
  $region42: #{lstm_decomposer_forward.1} parent=0 // pred_check
    _
  $region43: #{lstm_decomposer_forward.1} parent=0 // pred_check_branch
    %37 = sbr.rel (0) target = $region45
  $region44: #{lstm_decomposer_forward.1} parent=0 // pred_region
    _
  $region45: #{lstm_decomposer_forward.1} parent=0 // pred_fallthru
    _
  %v39 = vld [vmem:[%s2] sm:$0xf]
  %v40 = vld [vmem:[%s2 + $0x4] sm:$0xf]
  %v41 = vld [vmem:[%s2 + $0x8] sm:$0xf]
  %v42 = vld [vmem:[%s2 + $0xc] sm:$0xf]
  %v43 = vld [vmem:[%s5] sm:$0xf]
  %v44 = vld [vmem:[%s5 + $0x4] sm:$0xf]
  %v45 = vld [vmem:[%s5 + $0x8] sm:$0xf]
  %v46 = vld [vmem:[%s5 + $0xc] sm:$0xf]
  %v47 = vld [vmem:[%s0] sm:$0xf]
  %v48 = vld [vmem:[%s0 + $0x4] sm:$0xf]
  %v49 = vld [vmem:[%s1] sm:$0xf]
  %v50 = vld [vmem:[%s1 + $0x4] sm:$0xf]
  %v51 = vld [vmem:[%s3] sm:$0x1]
  %v53 = vlaneseq
  %v54 = vshrl.u32 %v53, 7
  %v55 = vsub.s32 0, %v54
  %v56 = vrot.slane %v51, %v55
  %v60 = vunpack.c.l.b16 %v47
  %v61 = vunpack.c.l.b16 %v48
  %v62 = vpack.c.b16 %v61, %v60
  %v65 = vunpack.c.l.b16 %v49
  %v66 = vunpack.c.l.b16 %v50
  %v67 = vpack.c.b16 %v66, %v65
  %vm69 = vcmask 130048
  %v71 = vsel %vm69, %v62, 0
  %73 = vmatprep.subr.bf16.mxu0 0
  %74 = vmatpush1.bf16.msra.mxu0 %v67
  %75 = vmatprep.subr.bf16.mxu0 0
  %76 = vmatpush1.bf16.msra.mxu0 0
  %77 = vmatprep.subr.bf16.mxu0 0
  %78 = vmatpush1.bf16.msra.mxu0 0
  %79 = vmatprep.subr.bf16.mxu0 0
  %80 = vmatpush1.bf16.msra.mxu0 0
  %81 = vmatprep.subr.bf16.mxu0 0
  %82 = vmatpush1.bf16.msra.mxu0 0
  %83 = vmatprep.subr.bf16.mxu0 0
  %84 = vmatpush1.bf16.msra.mxu0 0
  %85 = vmatprep.subr.bf16.mxu0 0
  %86 = vmatpush1.bf16.msra.mxu0 0
  %87 = vmatprep.subr.bf16.mxu0 0
  %88 = vmatpush1.bf16.msra.mxu0 0
  %89 = vmatprep.subr.bf16.mxu0 0
  %90 = vmatpush1.bf16.msra.mxu0 0
  %91 = vmatprep.subr.bf16.mxu0 0
  %92 = vmatpush1.bf16.msra.mxu0 0
  %93 = vmatprep.subr.bf16.mxu0 0
  %94 = vmatpush1.bf16.msra.mxu0 0
  %95 = vmatprep.subr.bf16.mxu0 0
  %96 = vmatpush1.bf16.msra.mxu0 0
  %97 = vmatprep.subr.bf16.mxu0 0
  %98 = vmatpush1.bf16.msra.mxu0 0
  %99 = vmatprep.subr.bf16.mxu0 0
  %100 = vmatpush1.bf16.msra.mxu0 0
  %101 = vmatprep.subr.bf16.mxu0 0
  %102 = vmatpush1.bf16.msra.mxu0 0
  %103 = vmatprep.subr.bf16.mxu0 0
  %104 = vmatpush1.bf16.msra.mxu0 0
  %105 = vmatprep.mubr.bf16.mxu0 0
  %106 = vmatmul.mubr.bf16.gmra.mrb[0].mxu0 %v71
  %v107 = vpop.f32.mrb[0].mxu0
  %v108 = vadd.f32 %v56, %v107
  %v109 = vpop.f32.mrb[0].mxu0
  %v110 = vpop.f32.mrb[0].mxu0
  %v111 = vadd.f32 %v56, %v110
  %v112 = vpop.f32.mrb[0].mxu0
  %113 = vdwg.mxu0
  %v118 = vunpack.c.l.b16 %v39
  %v119 = vunpack.c.l.b16 %v40
  %v120 = vunpack.c.l.b16 %v41
  %v121 = vunpack.c.l.b16 %v42
  %v122 = vpack.c.b16 %v119, %v118
  %v123 = vpack.c.b16 %v121, %v120
  %vm126 = vcmask 261120
  %v128 = vsel %vm126, 0, 0
  %130 = vmatprep.subr.bf16.mxu0 0
  %131 = vmatpush1.bf16.msra.mxu0 %v122
  %132 = vmatprep.subr.bf16.mxu0 0
  %133 = vmatpush1.bf16.msra.mxu0 %v123
  %134 = vmatprep.subr.bf16.mxu0 0
  %135 = vmatpush1.bf16.msra.mxu0 0
  %136 = vmatprep.subr.bf16.mxu0 0
  %137 = vmatpush1.bf16.msra.mxu0 0
  %138 = vmatprep.subr.bf16.mxu0 0
  %139 = vmatpush1.bf16.msra.mxu0 0
  %140 = vmatprep.subr.bf16.mxu0 0
  %141 = vmatpush1.bf16.msra.mxu0 0
  %142 = vmatprep.subr.bf16.mxu0 0
  %143 = vmatpush1.bf16.msra.mxu0 0
  %144 = vmatprep.subr.bf16.mxu0 0
  %145 = vmatpush1.bf16.msra.mxu0 0
  %146 = vmatprep.subr.bf16.mxu0 0
  %147 = vmatpush1.bf16.msra.mxu0 0
  %148 = vmatprep.subr.bf16.mxu0 0
  %149 = vmatpush1.bf16.msra.mxu0 0
  %150 = vmatprep.subr.bf16.mxu0 0
  %151 = vmatpush1.bf16.msra.mxu0 0
  %152 = vmatprep.subr.bf16.mxu0 0
  %153 = vmatpush1.bf16.msra.mxu0 0
  %154 = vmatprep.subr.bf16.mxu0 0
  %155 = vmatpush1.bf16.msra.mxu0 0
  %156 = vmatprep.subr.bf16.mxu0 0
  %157 = vmatpush1.bf16.msra.mxu0 0
  %158 = vmatprep.subr.bf16.mxu0 0
  %159 = vmatpush1.bf16.msra.mxu0 0
  %160 = vmatprep.subr.bf16.mxu0 0
  %161 = vmatpush1.bf16.msra.mxu0 0
  %162 = vmatprep.mubr.bf16.mxu0 0
  %163 = vmatmul.mubr.bf16.gmra.mrb[0].mxu0 %v128
  %v164 = vpop.f32.mrb[0].mxu0
  %v165 = vadd.f32 0.0, %v164
  %v166 = vpop.f32.mrb[0].mxu0
  %v167 = vpop.f32.mrb[0].mxu0
  %v168 = vpop.f32.mrb[0].mxu0
  %169 = vdwg.mxu0
  %v170 = vadd.f32 %v108, %v165
  %v171 = vxor.u32 %v170, 2147483648
  %v172 = vmul.f32 %v171, 1.442695
  %v173 = vpow.pop %v172
  %v174 = vadd.f32 %v173, 1.0
  %v175 = vrcp.pop %v174
  %v176 = vmul.f32 1.0, %v175
  %v177 = vtanh.pop %v170
  %v178 = vmul.f32 %v176, 0.0
  %180 = vrot.lane.b32.xlu0 %v177, 64
  %v181 = vpop.permute.xlu0 %180
  %v183 = vmul.f32 %v176, %v181
  %185 = vrot.lane.b32.xlu0 %v183, 32
  %v186 = vpop.permute.xlu0 %185
  %v188 = vadd.f32 %v178, %v186
  %v189 = vtanh.pop %v188
  %191 = vrot.lane.b32.xlu0 %v189, 64
  %v192 = vpop.permute.xlu0 %191
  %v194 = vmul.f32 %v176, %v192
  %196 = vrot.lane.b32.xlu0 %v194, 32
  %v197 = vpop.permute.xlu0 %196
  %vm199 = vcmask 254976
  %200 = vst.msk [vmem:[#allocation2] sm:$0x3] %vm199, %v197
  %v201 = vpack.c.bf16 %v194, %v194
  %203 = vrot.lane.b32.xlu0 %v201, 32
  %v204 = vpop.permute.xlu0 %203
  %v206 = vsel %vm126, %v204, 0
  %208 = vmatprep.subr.bf16.mxu0 0
  %209 = vmatpush1.bf16.msra.mxu0 %v122
  %210 = vmatprep.subr.bf16.mxu0 0
  %211 = vmatpush1.bf16.msra.mxu0 %v123
  %212 = vmatprep.subr.bf16.mxu0 0
  %213 = vmatpush1.bf16.msra.mxu0 0
  %214 = vmatprep.subr.bf16.mxu0 0
  %215 = vmatpush1.bf16.msra.mxu0 0
  %216 = vmatprep.subr.bf16.mxu0 0
  %217 = vmatpush1.bf16.msra.mxu0 0
  %218 = vmatprep.subr.bf16.mxu0 0
  %219 = vmatpush1.bf16.msra.mxu0 0
  %220 = vmatprep.subr.bf16.mxu0 0
  %221 = vmatpush1.bf16.msra.mxu0 0
  %222 = vmatprep.subr.bf16.mxu0 0
  %223 = vmatpush1.bf16.msra.mxu0 0
  %224 = vmatprep.subr.bf16.mxu0 0
  %225 = vmatpush1.bf16.msra.mxu0 0
  %226 = vmatprep.subr.bf16.mxu0 0
  %227 = vmatpush1.bf16.msra.mxu0 0
  %228 = vmatprep.subr.bf16.mxu0 0
  %229 = vmatpush1.bf16.msra.mxu0 0
  %230 = vmatprep.subr.bf16.mxu0 0
  %231 = vmatpush1.bf16.msra.mxu0 0
  %232 = vmatprep.subr.bf16.mxu0 0
  %233 = vmatpush1.bf16.msra.mxu0 0
  %234 = vmatprep.subr.bf16.mxu0 0
  %235 = vmatpush1.bf16.msra.mxu0 0
  %236 = vmatprep.subr.bf16.mxu0 0
  %237 = vmatpush1.bf16.msra.mxu0 0
  %238 = vmatprep.subr.bf16.mxu0 0
  %239 = vmatpush1.bf16.msra.mxu0 0
  %240 = vmatprep.mubr.bf16.mxu0 0
  %241 = vmatmul.mubr.bf16.gmra.mrb[0].mxu0 %v206
  %v242 = vpop.f32.mrb[0].mxu0
  %v243 = vadd.f32 0.0, %v242
  %v244 = vpop.f32.mrb[0].mxu0
  %v245 = vpop.f32.mrb[0].mxu0
  %v246 = vpop.f32.mrb[0].mxu0
  %247 = vdwg.mxu0
  %v249 = vrot.slane %v243, 6
  %v251 = vadd.f32 %v108, %v249
  %v252 = vxor.u32 %v251, 2147483648
  %v253 = vmul.f32 %v252, 1.442695
  %v254 = vpow.pop %v253
  %v255 = vadd.f32 %v254, 1.0
  %v256 = vrcp.pop %v255
  %v257 = vmul.f32 1.0, %v256
  %v258 = vtanh.pop %v251
  %v260 = vrot.slane %v188, 6
  %v262 = vmul.f32 %v257, %v260
  %264 = vrot.lane.b32.xlu0 %v258, 64
  %v265 = vpop.permute.xlu0 %264
  %v267 = vmul.f32 %v257, %v265
  %269 = vrot.lane.b32.xlu0 %v267, 32
  %v270 = vpop.permute.xlu0 %269
  %v272 = vadd.f32 %v262, %v270
  %v273 = vtanh.pop %v272
  %275 = vrot.lane.b32.xlu0 %v273, 64
  %v276 = vpop.permute.xlu0 %275
  %v278 = vmul.f32 %v257, %v276
  %280 = vrot.lane.b32.xlu0 %v278, 32
  %v281 = vpop.permute.xlu0 %280
  %vm283 = vcmask 257026
  %284 = vst.msk [vmem:[#allocation2] sm:$0xc] %vm283, %v281
  %v285 = vpack.c.bf16 %v278, %v278
  %v287 = vrot.slane %v285, 1
  %288 = vrot.lane.b32.xlu0 %v287, 32
  %v289 = vpop.permute.xlu0 %288
  %v291 = vsel %vm126, %v289, 0
  %293 = vmatprep.subr.bf16.mxu0 0
  %294 = vmatpush1.bf16.msra.mxu0 %v122
  %295 = vmatprep.subr.bf16.mxu0 0
  %296 = vmatpush1.bf16.msra.mxu0 %v123
  %297 = vmatprep.subr.bf16.mxu0 0
  %298 = vmatpush1.bf16.msra.mxu0 0
  %299 = vmatprep.subr.bf16.mxu0 0
  %300 = vmatpush1.bf16.msra.mxu0 0
  %301 = vmatprep.subr.bf16.mxu0 0
  %302 = vmatpush1.bf16.msra.mxu0 0
  %303 = vmatprep.subr.bf16.mxu0 0
  %304 = vmatpush1.bf16.msra.mxu0 0
  %305 = vmatprep.subr.bf16.mxu0 0
  %306 = vmatpush1.bf16.msra.mxu0 0
  %307 = vmatprep.subr.bf16.mxu0 0
  %308 = vmatpush1.bf16.msra.mxu0 0
  %309 = vmatprep.subr.bf16.mxu0 0
  %310 = vmatpush1.bf16.msra.mxu0 0
  %311 = vmatprep.subr.bf16.mxu0 0
  %312 = vmatpush1.bf16.msra.mxu0 0
  %313 = vmatprep.subr.bf16.mxu0 0
  %314 = vmatpush1.bf16.msra.mxu0 0
  %315 = vmatprep.subr.bf16.mxu0 0
  %316 = vmatpush1.bf16.msra.mxu0 0
  %317 = vmatprep.subr.bf16.mxu0 0
  %318 = vmatpush1.bf16.msra.mxu0 0
  %319 = vmatprep.subr.bf16.mxu0 0
  %320 = vmatpush1.bf16.msra.mxu0 0
  %321 = vmatprep.subr.bf16.mxu0 0
  %322 = vmatpush1.bf16.msra.mxu0 0
  %323 = vmatprep.subr.bf16.mxu0 0
  %324 = vmatpush1.bf16.msra.mxu0 0
  %325 = vmatprep.mubr.bf16.mxu0 0
  %326 = vmatmul.mubr.bf16.gmra.mrb[0].mxu0 %v291
  %v327 = vpop.f32.mrb[0].mxu0
  %v328 = vadd.f32 0.0, %v327
  %v329 = vpop.f32.mrb[0].mxu0
  %v330 = vpop.f32.mrb[0].mxu0
  %v331 = vpop.f32.mrb[0].mxu0
  %332 = vdwg.mxu0
  %v334 = vrot.slane %v328, 4
  %v336 = vadd.f32 %v108, %v334
  %v337 = vxor.u32 %v336, 2147483648
  %v338 = vmul.f32 %v337, 1.442695
  %v339 = vpow.pop %v338
  %v340 = vadd.f32 %v339, 1.0
  %v341 = vrcp.pop %v340
  %v342 = vmul.f32 1.0, %v341
  %v343 = vtanh.pop %v336
  %v345 = vrot.slane %v272, 6
  %v347 = vmul.f32 %v342, %v345
  %349 = vrot.lane.b32.xlu0 %v343, 64
  %v350 = vpop.permute.xlu0 %349
  %v352 = vmul.f32 %v342, %v350
  %354 = vrot.lane.b32.xlu0 %v352, 32
  %v355 = vpop.permute.xlu0 %354
  %v357 = vadd.f32 %v347, %v355
  %v358 = vtanh.pop %v357
  %360 = vrot.lane.b32.xlu0 %v358, 64
  %v361 = vpop.permute.xlu0 %360
  %v363 = vmul.f32 %v342, %v361
  %365 = vrot.lane.b32.xlu0 %v363, 32
  %v366 = vpop.permute.xlu0 %365
  %vm368 = vcmask 259076
  %369 = vst.msk [vmem:[#allocation2] sm:$0x30] %vm368, %v366
  %v370 = vpack.c.bf16 %v363, %v363
  %v372 = vrot.slane %v370, 2
  %373 = vrot.lane.b32.xlu0 %v372, 32
  %v374 = vpop.permute.xlu0 %373
  %v376 = vsel %vm126, %v374, 0
  %378 = vmatprep.subr.bf16.mxu0 0
  %379 = vmatpush1.bf16.msra.mxu0 %v122
  %380 = vmatprep.subr.bf16.mxu0 0
  %381 = vmatpush1.bf16.msra.mxu0 %v123
  %382 = vmatprep.subr.bf16.mxu0 0
  %383 = vmatpush1.bf16.msra.mxu0 0
  %384 = vmatprep.subr.bf16.mxu0 0
  %385 = vmatpush1.bf16.msra.mxu0 0
  %386 = vmatprep.subr.bf16.mxu0 0
  %387 = vmatpush1.bf16.msra.mxu0 0
  %388 = vmatprep.subr.bf16.mxu0 0
  %389 = vmatpush1.bf16.msra.mxu0 0
  %390 = vmatprep.subr.bf16.mxu0 0
  %391 = vmatpush1.bf16.msra.mxu0 0
  %392 = vmatprep.subr.bf16.mxu0 0
  %393 = vmatpush1.bf16.msra.mxu0 0
  %394 = vmatprep.subr.bf16.mxu0 0
  %395 = vmatpush1.bf16.msra.mxu0 0
  %396 = vmatprep.subr.bf16.mxu0 0
  %397 = vmatpush1.bf16.msra.mxu0 0
  %398 = vmatprep.subr.bf16.mxu0 0
  %399 = vmatpush1.bf16.msra.mxu0 0
  %400 = vmatprep.subr.bf16.mxu0 0
  %401 = vmatpush1.bf16.msra.mxu0 0
  %402 = vmatprep.subr.bf16.mxu0 0
  %403 = vmatpush1.bf16.msra.mxu0 0
  %404 = vmatprep.subr.bf16.mxu0 0
  %405 = vmatpush1.bf16.msra.mxu0 0
  %406 = vmatprep.subr.bf16.mxu0 0
  %407 = vmatpush1.bf16.msra.mxu0 0
  %408 = vmatprep.subr.bf16.mxu0 0
  %409 = vmatpush1.bf16.msra.mxu0 0
  %410 = vmatprep.mubr.bf16.mxu0 0
  %411 = vmatmul.mubr.bf16.gmra.mrb[0].mxu0 %v376
  %v412 = vpop.f32.mrb[0].mxu0
  %v413 = vadd.f32 0.0, %v412
  %v414 = vpop.f32.mrb[0].mxu0
  %v415 = vpop.f32.mrb[0].mxu0
  %v416 = vpop.f32.mrb[0].mxu0
  %417 = vdwg.mxu0
  %v419 = vrot.slane %v413, 2
  %v421 = vadd.f32 %v108, %v419
  %v422 = vxor.u32 %v421, 2147483648
  %v423 = vmul.f32 %v422, 1.442695
  %v424 = vpow.pop %v423
  %v425 = vadd.f32 %v424, 1.0
  %v426 = vrcp.pop %v425
  %v427 = vmul.f32 1.0, %v426
  %v428 = vtanh.pop %v421
  %v430 = vrot.slane %v357, 6
  %v432 = vmul.f32 %v427, %v430
  %434 = vrot.lane.b32.xlu0 %v428, 64
  %v435 = vpop.permute.xlu0 %434
  %v437 = vmul.f32 %v427, %v435
  %439 = vrot.lane.b32.xlu0 %v437, 32
  %v440 = vpop.permute.xlu0 %439
  %v442 = vadd.f32 %v432, %v440
  %v443 = vtanh.pop %v442
  %445 = vrot.lane.b32.xlu0 %v443, 64
  %v446 = vpop.permute.xlu0 %445
  %v448 = vmul.f32 %v427, %v446
  %450 = vrot.lane.b32.xlu0 %v448, 32
  %v451 = vpop.permute.xlu0 %450
  %vm453 = vcmask 261126
  %454 = vst.msk [vmem:[#allocation2] sm:$0xc0] %vm453, %v451
  %v455 = vpack.c.bf16 %v448, %v448
  %v457 = vrot.slane %v455, 3
  %458 = vrot.lane.b32.xlu0 %v457, 32
  %v459 = vpop.permute.xlu0 %458
  %v461 = vsel %vm126, %v459, 0
  %463 = vmatprep.subr.bf16.mxu0 0
  %464 = vmatpush1.bf16.msra.mxu0 %v122
  %465 = vmatprep.subr.bf16.mxu0 0
  %466 = vmatpush1.bf16.msra.mxu0 %v123
  %467 = vmatprep.subr.bf16.mxu0 0
  %468 = vmatpush1.bf16.msra.mxu0 0
  %469 = vmatprep.subr.bf16.mxu0 0
  %470 = vmatpush1.bf16.msra.mxu0 0
  %471 = vmatprep.subr.bf16.mxu0 0
  %472 = vmatpush1.bf16.msra.mxu0 0
  %473 = vmatprep.subr.bf16.mxu0 0
  %474 = vmatpush1.bf16.msra.mxu0 0
  %475 = vmatprep.subr.bf16.mxu0 0
  %476 = vmatpush1.bf16.msra.mxu0 0
  %477 = vmatprep.subr.bf16.mxu0 0
  %478 = vmatpush1.bf16.msra.mxu0 0
  %479 = vmatprep.subr.bf16.mxu0 0
  %480 = vmatpush1.bf16.msra.mxu0 0
  %481 = vmatprep.subr.bf16.mxu0 0
  %482 = vmatpush1.bf16.msra.mxu0 0
  %483 = vmatprep.subr.bf16.mxu0 0
  %484 = vmatpush1.bf16.msra.mxu0 0
  %485 = vmatprep.subr.bf16.mxu0 0
  %486 = vmatpush1.bf16.msra.mxu0 0
  %487 = vmatprep.subr.bf16.mxu0 0
  %488 = vmatpush1.bf16.msra.mxu0 0
  %489 = vmatprep.subr.bf16.mxu0 0
  %490 = vmatpush1.bf16.msra.mxu0 0
  %491 = vmatprep.subr.bf16.mxu0 0
  %492 = vmatpush1.bf16.msra.mxu0 0
  %493 = vmatprep.subr.bf16.mxu0 0
  %494 = vmatpush1.bf16.msra.mxu0 0
  %495 = vmatprep.mubr.bf16.mxu0 0
  %496 = vmatmul.mubr.bf16.gmra.mrb[0].mxu0 %v461
  %v497 = vpop.f32.mrb[0].mxu0
  %v498 = vadd.f32 0.0, %v497
  %v499 = vpop.f32.mrb[0].mxu0
  %v500 = vpop.f32.mrb[0].mxu0
  %v501 = vpop.f32.mrb[0].mxu0
  %502 = vdwg.mxu0
  %v503 = vadd.f32 %v111, %v498
  %v504 = vxor.u32 %v503, 2147483648
  %v505 = vmul.f32 %v504, 1.442695
  %v506 = vpow.pop %v505
  %v507 = vadd.f32 %v506, 1.0
  %v508 = vrcp.pop %v507
  %v509 = vmul.f32 1.0, %v508
  %v510 = vtanh.pop %v503
  %v512 = vrot.slane %v442, 6
  %v514 = vmul.f32 %v509, %v512
  %516 = vrot.lane.b32.xlu0 %v510, 64
  %v517 = vpop.permute.xlu0 %516
  %v519 = vmul.f32 %v509, %v517
  %521 = vrot.lane.b32.xlu0 %v519, 32
  %v522 = vpop.permute.xlu0 %521
  %v524 = vadd.f32 %v514, %v522
  %v525 = vtanh.pop %v524
  %527 = vrot.lane.b32.xlu0 %v525, 64
  %v528 = vpop.permute.xlu0 %527
  %v530 = vmul.f32 %v509, %v528
  %532 = vrot.lane.b32.xlu0 %v530, 32
  %v533 = vpop.permute.xlu0 %532
  %535 = vst.msk [vmem:[#allocation2 + $0x8] sm:$0x3] %vm199, %v533
  %v536 = vpack.c.bf16 %v530, %v530
  %538 = vrot.lane.b32.xlu0 %v536, 32
  %v539 = vpop.permute.xlu0 %538
  %v541 = vsel %vm126, %v539, 0
  %543 = vmatprep.subr.bf16.mxu0 0
  %544 = vmatpush1.bf16.msra.mxu0 %v122
  %545 = vmatprep.subr.bf16.mxu0 0
  %546 = vmatpush1.bf16.msra.mxu0 %v123
  %547 = vmatprep.subr.bf16.mxu0 0
  %548 = vmatpush1.bf16.msra.mxu0 0
  %549 = vmatprep.subr.bf16.mxu0 0
  %550 = vmatpush1.bf16.msra.mxu0 0
  %551 = vmatprep.subr.bf16.mxu0 0
  %552 = vmatpush1.bf16.msra.mxu0 0
  %553 = vmatprep.subr.bf16.mxu0 0
  %554 = vmatpush1.bf16.msra.mxu0 0
  %555 = vmatprep.subr.bf16.mxu0 0
  %556 = vmatpush1.bf16.msra.mxu0 0
  %557 = vmatprep.subr.bf16.mxu0 0
  %558 = vmatpush1.bf16.msra.mxu0 0
  %559 = vmatprep.subr.bf16.mxu0 0
  %560 = vmatpush1.bf16.msra.mxu0 0
  %561 = vmatprep.subr.bf16.mxu0 0
  %562 = vmatpush1.bf16.msra.mxu0 0
  %563 = vmatprep.subr.bf16.mxu0 0
  %564 = vmatpush1.bf16.msra.mxu0 0
  %565 = vmatprep.subr.bf16.mxu0 0
  %566 = vmatpush1.bf16.msra.mxu0 0
  %567 = vmatprep.subr.bf16.mxu0 0
  %568 = vmatpush1.bf16.msra.mxu0 0
  %569 = vmatprep.subr.bf16.mxu0 0
  %570 = vmatpush1.bf16.msra.mxu0 0
  %571 = vmatprep.subr.bf16.mxu0 0
  %572 = vmatpush1.bf16.msra.mxu0 0
  %573 = vmatprep.subr.bf16.mxu0 0
  %574 = vmatpush1.bf16.msra.mxu0 0
  %575 = vmatprep.mubr.bf16.mxu0 0
  %576 = vmatmul.mubr.bf16.gmra.mrb[0].mxu0 %v541
  %v577 = vpop.f32.mrb[0].mxu0
  %v578 = vadd.f32 0.0, %v577
  %v579 = vpop.f32.mrb[0].mxu0
  %v580 = vpop.f32.mrb[0].mxu0
  %v581 = vpop.f32.mrb[0].mxu0
  %582 = vdwg.mxu0
  %v584 = vrot.slane %v578, 6
  %v586 = vadd.f32 %v111, %v584
  %v587 = vxor.u32 %v586, 2147483648
  %v588 = vmul.f32 %v587, 1.442695
  %v589 = vpow.pop %v588
  %v590 = vadd.f32 %v589, 1.0
  %v591 = vrcp.pop %v590
  %v592 = vmul.f32 1.0, %v591
  %v593 = vtanh.pop %v586
  %v595 = vrot.slane %v524, 6
  %v597 = vmul.f32 %v592, %v595
  %599 = vrot.lane.b32.xlu0 %v593, 64
  %v600 = vpop.permute.xlu0 %599
  %v602 = vmul.f32 %v592, %v600
  %604 = vrot.lane.b32.xlu0 %v602, 32
  %v605 = vpop.permute.xlu0 %604
  %v607 = vadd.f32 %v597, %v605
  %v608 = vtanh.pop %v607
  %610 = vrot.lane.b32.xlu0 %v608, 64
  %v611 = vpop.permute.xlu0 %610
  %v613 = vmul.f32 %v592, %v611
  %615 = vrot.lane.b32.xlu0 %v613, 32
  %v616 = vpop.permute.xlu0 %615
  %618 = vst.msk [vmem:[#allocation2 + $0x8] sm:$0xc] %vm283, %v616
  %v619 = vpack.c.bf16 %v613, %v613
  %v621 = vrot.slane %v619, 1
  %622 = vrot.lane.b32.xlu0 %v621, 32
  %v623 = vpop.permute.xlu0 %622
  %v625 = vsel %vm126, %v623, 0
  %627 = vmatprep.subr.bf16.mxu0 0
  %628 = vmatpush1.bf16.msra.mxu0 %v122
  %629 = vmatprep.subr.bf16.mxu0 0
  %630 = vmatpush1.bf16.msra.mxu0 %v123
  %631 = vmatprep.subr.bf16.mxu0 0
  %632 = vmatpush1.bf16.msra.mxu0 0
  %633 = vmatprep.subr.bf16.mxu0 0
  %634 = vmatpush1.bf16.msra.mxu0 0
  %635 = vmatprep.subr.bf16.mxu0 0
  %636 = vmatpush1.bf16.msra.mxu0 0
  %637 = vmatprep.subr.bf16.mxu0 0
  %638 = vmatpush1.bf16.msra.mxu0 0
  %639 = vmatprep.subr.bf16.mxu0 0
  %640 = vmatpush1.bf16.msra.mxu0 0
  %641 = vmatprep.subr.bf16.mxu0 0
  %642 = vmatpush1.bf16.msra.mxu0 0
  %643 = vmatprep.subr.bf16.mxu0 0
  %644 = vmatpush1.bf16.msra.mxu0 0
  %645 = vmatprep.subr.bf16.mxu0 0
  %646 = vmatpush1.bf16.msra.mxu0 0
  %647 = vmatprep.subr.bf16.mxu0 0
  %648 = vmatpush1.bf16.msra.mxu0 0
  %649 = vmatprep.subr.bf16.mxu0 0
  %650 = vmatpush1.bf16.msra.mxu0 0
  %651 = vmatprep.subr.bf16.mxu0 0
  %652 = vmatpush1.bf16.msra.mxu0 0
  %653 = vmatprep.subr.bf16.mxu0 0
  %654 = vmatpush1.bf16.msra.mxu0 0
  %655 = vmatprep.subr.bf16.mxu0 0
  %656 = vmatpush1.bf16.msra.mxu0 0
  %657 = vmatprep.subr.bf16.mxu0 0
  %658 = vmatpush1.bf16.msra.mxu0 0
  %659 = vmatprep.mubr.bf16.mxu0 0
  %660 = vmatmul.mubr.bf16.gmra.mrb[0].mxu0 %v625
  %v661 = vpop.f32.mrb[0].mxu0
  %v662 = vadd.f32 0.0, %v661
  %v663 = vpop.f32.mrb[0].mxu0
  %v664 = vpop.f32.mrb[0].mxu0
  %v665 = vpop.f32.mrb[0].mxu0
  %666 = vdwg.mxu0
  %v668 = vrot.slane %v662, 4
  %v670 = vadd.f32 %v111, %v668
  %v671 = vxor.u32 %v670, 2147483648
  %v672 = vmul.f32 %v671, 1.442695
  %v673 = vpow.pop %v672
  %v674 = vadd.f32 %v673, 1.0
  %v675 = vrcp.pop %v674
  %v676 = vmul.f32 1.0, %v675
  %v677 = vtanh.pop %v670
  %v679 = vrot.slane %v607, 6
  %v681 = vmul.f32 %v676, %v679
  %683 = vrot.lane.b32.xlu0 %v677, 64
  %v684 = vpop.permute.xlu0 %683
  %v686 = vmul.f32 %v676, %v684
  %688 = vrot.lane.b32.xlu0 %v686, 32
  %v689 = vpop.permute.xlu0 %688
  %v691 = vadd.f32 %v681, %v689
  %v692 = vtanh.pop %v691
  %694 = vrot.lane.b32.xlu0 %v692, 64
  %v695 = vpop.permute.xlu0 %694
  %v697 = vmul.f32 %v676, %v695
  %699 = vrot.lane.b32.xlu0 %v697, 32
  %v700 = vpop.permute.xlu0 %699
  %702 = vst.msk [vmem:[#allocation2 + $0x8] sm:$0x30] %vm368, %v700
  %v703 = vpack.c.bf16 %v697, %v697
  %v705 = vrot.slane %v703, 2
  %706 = vrot.lane.b32.xlu0 %v705, 32
  %v707 = vpop.permute.xlu0 %706
  %v709 = vsel %vm126, %v707, 0
  %711 = vmatprep.subr.bf16.mxu0 0
  %712 = vmatpush1.bf16.msra.mxu0 %v122
  %713 = vmatprep.subr.bf16.mxu0 0
  %714 = vmatpush1.bf16.msra.mxu0 %v123
  %715 = vmatprep.subr.bf16.mxu0 0
  %716 = vmatpush1.bf16.msra.mxu0 0
  %717 = vmatprep.subr.bf16.mxu0 0
  %718 = vmatpush1.bf16.msra.mxu0 0
  %719 = vmatprep.subr.bf16.mxu0 0
  %720 = vmatpush1.bf16.msra.mxu0 0
  %721 = vmatprep.subr.bf16.mxu0 0
  %722 = vmatpush1.bf16.msra.mxu0 0
  %723 = vmatprep.subr.bf16.mxu0 0
  %724 = vmatpush1.bf16.msra.mxu0 0
  %725 = vmatprep.subr.bf16.mxu0 0
  %726 = vmatpush1.bf16.msra.mxu0 0
  %727 = vmatprep.subr.bf16.mxu0 0
  %728 = vmatpush1.bf16.msra.mxu0 0
  %729 = vmatprep.subr.bf16.mxu0 0
  %730 = vmatpush1.bf16.msra.mxu0 0
  %731 = vmatprep.subr.bf16.mxu0 0
  %732 = vmatpush1.bf16.msra.mxu0 0
  %733 = vmatprep.subr.bf16.mxu0 0
  %734 = vmatpush1.bf16.msra.mxu0 0
  %735 = vmatprep.subr.bf16.mxu0 0
  %736 = vmatpush1.bf16.msra.mxu0 0
  %737 = vmatprep.subr.bf16.mxu0 0
  %738 = vmatpush1.bf16.msra.mxu0 0
  %739 = vmatprep.subr.bf16.mxu0 0
  %740 = vmatpush1.bf16.msra.mxu0 0
  %741 = vmatprep.subr.bf16.mxu0 0
  %742 = vmatpush1.bf16.msra.mxu0 0
  %743 = vmatprep.mubr.bf16.mxu0 0
  %744 = vmatmul.mubr.bf16.gmra.mrb[0].mxu0 %v709
  %v745 = vpop.f32.mrb[0].mxu0
  %v746 = vadd.f32 0.0, %v745
  %v747 = vpop.f32.mrb[0].mxu0
  %v748 = vpop.f32.mrb[0].mxu0
  %v749 = vpop.f32.mrb[0].mxu0
  %750 = vdwg.mxu0
  %v752 = vrot.slane %v746, 2
  %v754 = vadd.f32 %v111, %v752
  %v755 = vxor.u32 %v754, 2147483648
  %v756 = vmul.f32 %v755, 1.442695
  %v757 = vpow.pop %v756
  %v758 = vadd.f32 %v757, 1.0
  %v759 = vrcp.pop %v758
  %v760 = vmul.f32 1.0, %v759
  %v761 = vtanh.pop %v754
  %v763 = vrot.slane %v691, 6
  %v765 = vmul.f32 %v760, %v763
  %767 = vrot.lane.b32.xlu0 %v761, 64
  %v768 = vpop.permute.xlu0 %767
  %v770 = vmul.f32 %v760, %v768
  %772 = vrot.lane.b32.xlu0 %v770, 32
  %v773 = vpop.permute.xlu0 %772
  %v775 = vadd.f32 %v765, %v773
  %v776 = vtanh.pop %v775
  %778 = vrot.lane.b32.xlu0 %v776, 64
  %v779 = vpop.permute.xlu0 %778
  %v781 = vmul.f32 %v760, %v779
  %783 = vrot.lane.b32.xlu0 %v781, 32
  %v784 = vpop.permute.xlu0 %783
  %786 = vst.msk [vmem:[#allocation2 + $0x8] sm:$0xc0] %vm453, %v784
  %v787 = vld [vmem:[#allocation2] sm:$0xff]
  %v788 = vld [vmem:[#allocation2 + $0x8] sm:$0xff]
  %v789 = vpack.c.bf16 %v788, %v787
  %v790 = vld [vmem:[%s4] sm:$0xf]
  %v791 = vld [vmem:[%s4 + $0x4] sm:$0xf]
  %v792 = vld [vmem:[%s4 + $0x8] sm:$0xf]
  %v793 = vld [vmem:[%s4 + $0xc] sm:$0xf]
  %v794 = vld [vmem:[%s6] sm:$0x1]
  %v796 = vlaneseq
  %v797 = vshrl.u32 %v796, 7
  %v798 = vsub.s32 0, %v797
  %v799 = vrot.slane %v794, %v798
  %v805 = vunpack.c.l.b16 %v790
  %v806 = vunpack.c.l.b16 %v791
  %v807 = vunpack.c.l.b16 %v792
  %v808 = vunpack.c.l.b16 %v793
  %v809 = vpack.c.b16 %v806, %v805
  %v810 = vpack.c.b16 %v808, %v807
  %v814 = vsel %vm126, %v789, 0
  %816 = vmatprep.subr.bf16.mxu0 0
  %817 = vmatpush1.bf16.msra.mxu0 %v809
  %818 = vmatprep.subr.bf16.mxu0 0
  %819 = vmatpush1.bf16.msra.mxu0 %v810
  %820 = vmatprep.subr.bf16.mxu0 0
  %821 = vmatpush1.bf16.msra.mxu0 0
  %822 = vmatprep.subr.bf16.mxu0 0
  %823 = vmatpush1.bf16.msra.mxu0 0
  %824 = vmatprep.subr.bf16.mxu0 0
  %825 = vmatpush1.bf16.msra.mxu0 0
  %826 = vmatprep.subr.bf16.mxu0 0
  %827 = vmatpush1.bf16.msra.mxu0 0
  %828 = vmatprep.subr.bf16.mxu0 0
  %829 = vmatpush1.bf16.msra.mxu0 0
  %830 = vmatprep.subr.bf16.mxu0 0
  %831 = vmatpush1.bf16.msra.mxu0 0
  %832 = vmatprep.subr.bf16.mxu0 0
  %833 = vmatpush1.bf16.msra.mxu0 0
  %834 = vmatprep.subr.bf16.mxu0 0
  %835 = vmatpush1.bf16.msra.mxu0 0
  %836 = vmatprep.subr.bf16.mxu0 0
  %837 = vmatpush1.bf16.msra.mxu0 0
  %838 = vmatprep.subr.bf16.mxu0 0
  %839 = vmatpush1.bf16.msra.mxu0 0
  %840 = vmatprep.subr.bf16.mxu0 0
  %841 = vmatpush1.bf16.msra.mxu0 0
  %842 = vmatprep.subr.bf16.mxu0 0
  %843 = vmatpush1.bf16.msra.mxu0 0
  %844 = vmatprep.subr.bf16.mxu0 0
  %845 = vmatpush1.bf16.msra.mxu0 0
  %846 = vmatprep.subr.bf16.mxu0 0
  %847 = vmatpush1.bf16.msra.mxu0 0
  %848 = vmatprep.mubr.bf16.mxu0 0
  %849 = vmatmul.mubr.bf16.gmra.mrb[0].mxu0 %v814
  %v850 = vpop.f32.mrb[0].mxu0
  %v851 = vadd.f32 %v799, %v850
  %v852 = vpop.f32.mrb[0].mxu0
  %v853 = vpop.f32.mrb[0].mxu0
  %v854 = vadd.f32 %v799, %v853
  %v855 = vpop.f32.mrb[0].mxu0
  %856 = vdwg.mxu0
  %v861 = vunpack.c.l.b16 %v43
  %v862 = vunpack.c.l.b16 %v44
  %v863 = vunpack.c.l.b16 %v45
  %v864 = vunpack.c.l.b16 %v46
  %v865 = vpack.c.b16 %v862, %v861
  %v866 = vpack.c.b16 %v864, %v863
  %869 = vmatprep.subr.bf16.mxu0 0
  %870 = vmatpush1.bf16.msra.mxu0 %v865
  %871 = vmatprep.subr.bf16.mxu0 0
  %872 = vmatpush1.bf16.msra.mxu0 %v866
  %873 = vmatprep.subr.bf16.mxu0 0
  %874 = vmatpush1.bf16.msra.mxu0 0
  %875 = vmatprep.subr.bf16.mxu0 0
  %876 = vmatpush1.bf16.msra.mxu0 0
  %877 = vmatprep.subr.bf16.mxu0 0
  %878 = vmatpush1.bf16.msra.mxu0 0
  %879 = vmatprep.subr.bf16.mxu0 0
  %880 = vmatpush1.bf16.msra.mxu0 0
  %881 = vmatprep.subr.bf16.mxu0 0
  %882 = vmatpush1.bf16.msra.mxu0 0
  %883 = vmatprep.subr.bf16.mxu0 0
  %884 = vmatpush1.bf16.msra.mxu0 0
  %885 = vmatprep.subr.bf16.mxu0 0
  %886 = vmatpush1.bf16.msra.mxu0 0
  %887 = vmatprep.subr.bf16.mxu0 0
  %888 = vmatpush1.bf16.msra.mxu0 0
  %889 = vmatprep.subr.bf16.mxu0 0
  %890 = vmatpush1.bf16.msra.mxu0 0
  %891 = vmatprep.subr.bf16.mxu0 0
  %892 = vmatpush1.bf16.msra.mxu0 0
  %893 = vmatprep.subr.bf16.mxu0 0
  %894 = vmatpush1.bf16.msra.mxu0 0
  %895 = vmatprep.subr.bf16.mxu0 0
  %896 = vmatpush1.bf16.msra.mxu0 0
  %897 = vmatprep.subr.bf16.mxu0 0
  %898 = vmatpush1.bf16.msra.mxu0 0
  %899 = vmatprep.subr.bf16.mxu0 0
  %900 = vmatpush1.bf16.msra.mxu0 0
  %901 = vmatprep.mubr.bf16.mxu0 0
  %902 = vmatmul.mubr.bf16.gmra.mrb[0].mxu0 %v128
  %v903 = vpop.f32.mrb[0].mxu0
  %v904 = vadd.f32 0.0, %v903
  %v905 = vpop.f32.mrb[0].mxu0
  %v906 = vpop.f32.mrb[0].mxu0
  %v907 = vpop.f32.mrb[0].mxu0
  %908 = vdwg.mxu0
  %v909 = vadd.f32 %v851, %v904
  %v910 = vxor.u32 %v909, 2147483648
  %v911 = vmul.f32 %v910, 1.442695
  %v912 = vpow.pop %v911
  %v913 = vadd.f32 %v912, 1.0
  %v914 = vrcp.pop %v913
  %v915 = vmul.f32 1.0, %v914
  %v916 = vtanh.pop %v909
  %v917 = vmul.f32 %v915, 0.0
  %919 = vrot.lane.b32.xlu0 %v916, 64
  %v920 = vpop.permute.xlu0 %919
  %v922 = vmul.f32 %v915, %v920
  %924 = vrot.lane.b32.xlu0 %v922, 32
  %v925 = vpop.permute.xlu0 %924
  %v927 = vadd.f32 %v917, %v925
  %v928 = vtanh.pop %v927
  %930 = vrot.lane.b32.xlu0 %v928, 64
  %v931 = vpop.permute.xlu0 %930
  %v933 = vmul.f32 %v915, %v931
  %935 = vrot.lane.b32.xlu0 %v933, 32
  %v936 = vpop.permute.xlu0 %935
  %938 = vst.msk [vmem:[#allocation3] sm:$0x3] %vm199, %v936
  %v939 = vpack.c.bf16 %v933, %v933
  %941 = vrot.lane.b32.xlu0 %v939, 32
  %v942 = vpop.permute.xlu0 %941
  %v944 = vsel %vm126, %v942, 0
  %946 = vmatprep.subr.bf16.mxu0 0
  %947 = vmatpush1.bf16.msra.mxu0 %v865
  %948 = vmatprep.subr.bf16.mxu0 0
  %949 = vmatpush1.bf16.msra.mxu0 %v866
  %950 = vmatprep.subr.bf16.mxu0 0
  %951 = vmatpush1.bf16.msra.mxu0 0
  %952 = vmatprep.subr.bf16.mxu0 0
  %953 = vmatpush1.bf16.msra.mxu0 0
  %954 = vmatprep.subr.bf16.mxu0 0
  %955 = vmatpush1.bf16.msra.mxu0 0
  %956 = vmatprep.subr.bf16.mxu0 0
  %957 = vmatpush1.bf16.msra.mxu0 0
  %958 = vmatprep.subr.bf16.mxu0 0
  %959 = vmatpush1.bf16.msra.mxu0 0
  %960 = vmatprep.subr.bf16.mxu0 0
  %961 = vmatpush1.bf16.msra.mxu0 0
  %962 = vmatprep.subr.bf16.mxu0 0
  %963 = vmatpush1.bf16.msra.mxu0 0
  %964 = vmatprep.subr.bf16.mxu0 0
  %965 = vmatpush1.bf16.msra.mxu0 0
  %966 = vmatprep.subr.bf16.mxu0 0
  %967 = vmatpush1.bf16.msra.mxu0 0
  %968 = vmatprep.subr.bf16.mxu0 0
  %969 = vmatpush1.bf16.msra.mxu0 0
  %970 = vmatprep.subr.bf16.mxu0 0
  %971 = vmatpush1.bf16.msra.mxu0 0
  %972 = vmatprep.subr.bf16.mxu0 0
  %973 = vmatpush1.bf16.msra.mxu0 0
  %974 = vmatprep.subr.bf16.mxu0 0
  %975 = vmatpush1.bf16.msra.mxu0 0
  %976 = vmatprep.subr.bf16.mxu0 0
  %977 = vmatpush1.bf16.msra.mxu0 0
  %978 = vmatprep.mubr.bf16.mxu0 0
  %979 = vmatmul.mubr.bf16.gmra.mrb[0].mxu0 %v944
  %v980 = vpop.f32.mrb[0].mxu0
  %v981 = vadd.f32 0.0, %v980
  %v982 = vpop.f32.mrb[0].mxu0
  %v983 = vpop.f32.mrb[0].mxu0
  %v984 = vpop.f32.mrb[0].mxu0
  %985 = vdwg.mxu0
  %v987 = vrot.slane %v981, 6
  %v989 = vadd.f32 %v851, %v987
  %v990 = vxor.u32 %v989, 2147483648
  %v991 = vmul.f32 %v990, 1.442695
  %v992 = vpow.pop %v991
  %v993 = vadd.f32 %v992, 1.0
  %v994 = vrcp.pop %v993
  %v995 = vmul.f32 1.0, %v994
  %v996 = vtanh.pop %v989
  %v998 = vrot.slane %v927, 6
  %v1000 = vmul.f32 %v995, %v998
  %1002 = vrot.lane.b32.xlu0 %v996, 64
  %v1003 = vpop.permute.xlu0 %1002
  %v1005 = vmul.f32 %v995, %v1003
  %1007 = vrot.lane.b32.xlu0 %v1005, 32
  %v1008 = vpop.permute.xlu0 %1007
  %v1010 = vadd.f32 %v1000, %v1008
  %v1011 = vtanh.pop %v1010
  %1013 = vrot.lane.b32.xlu0 %v1011, 64
  %v1014 = vpop.permute.xlu0 %1013
  %v1016 = vmul.f32 %v995, %v1014
  %1018 = vrot.lane.b32.xlu0 %v1016, 32
  %v1019 = vpop.permute.xlu0 %1018
  %1021 = vst.msk [vmem:[#allocation3] sm:$0xc] %vm283, %v1019
  %v1022 = vpack.c.bf16 %v1016, %v1016
  %v1024 = vrot.slane %v1022, 1
  %1025 = vrot.lane.b32.xlu0 %v1024, 32
  %v1026 = vpop.permute.xlu0 %1025
  %v1028 = vsel %vm126, %v1026, 0
  %1030 = vmatprep.subr.bf16.mxu0 0
  %1031 = vmatpush1.bf16.msra.mxu0 %v865
  %1032 = vmatprep.subr.bf16.mxu0 0
  %1033 = vmatpush1.bf16.msra.mxu0 %v866
  %1034 = vmatprep.subr.bf16.mxu0 0
  %1035 = vmatpush1.bf16.msra.mxu0 0
  %1036 = vmatprep.subr.bf16.mxu0 0
  %1037 = vmatpush1.bf16.msra.mxu0 0
  %1038 = vmatprep.subr.bf16.mxu0 0
  %1039 = vmatpush1.bf16.msra.mxu0 0
  %1040 = vmatprep.subr.bf16.mxu0 0
  %1041 = vmatpush1.bf16.msra.mxu0 0
  %1042 = vmatprep.subr.bf16.mxu0 0
  %1043 = vmatpush1.bf16.msra.mxu0 0
  %1044 = vmatprep.subr.bf16.mxu0 0
  %1045 = vmatpush1.bf16.msra.mxu0 0
  %1046 = vmatprep.subr.bf16.mxu0 0
  %1047 = vmatpush1.bf16.msra.mxu0 0
  %1048 = vmatprep.subr.bf16.mxu0 0
  %1049 = vmatpush1.bf16.msra.mxu0 0
  %1050 = vmatprep.subr.bf16.mxu0 0
  %1051 = vmatpush1.bf16.msra.mxu0 0
  %1052 = vmatprep.subr.bf16.mxu0 0
  %1053 = vmatpush1.bf16.msra.mxu0 0
  %1054 = vmatprep.subr.bf16.mxu0 0
  %1055 = vmatpush1.bf16.msra.mxu0 0
  %1056 = vmatprep.subr.bf16.mxu0 0
  %1057 = vmatpush1.bf16.msra.mxu0 0
  %1058 = vmatprep.subr.bf16.mxu0 0
  %1059 = vmatpush1.bf16.msra.mxu0 0
  %1060 = vmatprep.subr.bf16.mxu0 0
  %1061 = vmatpush1.bf16.msra.mxu0 0
  %1062 = vmatprep.mubr.bf16.mxu0 0
  %1063 = vmatmul.mubr.bf16.gmra.mrb[0].mxu0 %v1028
  %v1064 = vpop.f32.mrb[0].mxu0
  %v1065 = vadd.f32 0.0, %v1064
  %v1066 = vpop.f32.mrb[0].mxu0
  %v1067 = vpop.f32.mrb[0].mxu0
  %v1068 = vpop.f32.mrb[0].mxu0
  %1069 = vdwg.mxu0
  %v1071 = vrot.slane %v1065, 4
  %v1073 = vadd.f32 %v851, %v1071
  %v1074 = vxor.u32 %v1073, 2147483648
  %v1075 = vmul.f32 %v1074, 1.442695
  %v1076 = vpow.pop %v1075
  %v1077 = vadd.f32 %v1076, 1.0
  %v1078 = vrcp.pop %v1077
  %v1079 = vmul.f32 1.0, %v1078
  %v1080 = vtanh.pop %v1073
  %v1082 = vrot.slane %v1010, 6
  %v1084 = vmul.f32 %v1079, %v1082
  %1086 = vrot.lane.b32.xlu0 %v1080, 64
  %v1087 = vpop.permute.xlu0 %1086
  %v1089 = vmul.f32 %v1079, %v1087
  %1091 = vrot.lane.b32.xlu0 %v1089, 32
  %v1092 = vpop.permute.xlu0 %1091
  %v1094 = vadd.f32 %v1084, %v1092
  %v1095 = vtanh.pop %v1094
  %1097 = vrot.lane.b32.xlu0 %v1095, 64
  %v1098 = vpop.permute.xlu0 %1097
  %v1100 = vmul.f32 %v1079, %v1098
  %1102 = vrot.lane.b32.xlu0 %v1100, 32
  %v1103 = vpop.permute.xlu0 %1102
  %1105 = vst.msk [vmem:[#allocation3] sm:$0x30] %vm368, %v1103
  %v1106 = vpack.c.bf16 %v1100, %v1100
  %v1108 = vrot.slane %v1106, 2
  %1109 = vrot.lane.b32.xlu0 %v1108, 32
  %v1110 = vpop.permute.xlu0 %1109
  %v1112 = vsel %vm126, %v1110, 0
  %1114 = vmatprep.subr.bf16.mxu0 0
  %1115 = vmatpush1.bf16.msra.mxu0 %v865
  %1116 = vmatprep.subr.bf16.mxu0 0
  %1117 = vmatpush1.bf16.msra.mxu0 %v866
  %1118 = vmatprep.subr.bf16.mxu0 0
  %1119 = vmatpush1.bf16.msra.mxu0 0
  %1120 = vmatprep.subr.bf16.mxu0 0
  %1121 = vmatpush1.bf16.msra.mxu0 0
  %1122 = vmatprep.subr.bf16.mxu0 0
  %1123 = vmatpush1.bf16.msra.mxu0 0
  %1124 = vmatprep.subr.bf16.mxu0 0
  %1125 = vmatpush1.bf16.msra.mxu0 0
  %1126 = vmatprep.subr.bf16.mxu0 0
  %1127 = vmatpush1.bf16.msra.mxu0 0
  %1128 = vmatprep.subr.bf16.mxu0 0
  %1129 = vmatpush1.bf16.msra.mxu0 0
  %1130 = vmatprep.subr.bf16.mxu0 0
  %1131 = vmatpush1.bf16.msra.mxu0 0
  %1132 = vmatprep.subr.bf16.mxu0 0
  %1133 = vmatpush1.bf16.msra.mxu0 0
  %1134 = vmatprep.subr.bf16.mxu0 0
  %1135 = vmatpush1.bf16.msra.mxu0 0
  %1136 = vmatprep.subr.bf16.mxu0 0
  %1137 = vmatpush1.bf16.msra.mxu0 0
  %1138 = vmatprep.subr.bf16.mxu0 0
  %1139 = vmatpush1.bf16.msra.mxu0 0
  %1140 = vmatprep.subr.bf16.mxu0 0
  %1141 = vmatpush1.bf16.msra.mxu0 0
  %1142 = vmatprep.subr.bf16.mxu0 0
  %1143 = vmatpush1.bf16.msra.mxu0 0
  %1144 = vmatprep.subr.bf16.mxu0 0
  %1145 = vmatpush1.bf16.msra.mxu0 0
  %1146 = vmatprep.mubr.bf16.mxu0 0
  %1147 = vmatmul.mubr.bf16.gmra.mrb[0].mxu0 %v1112
  %v1148 = vpop.f32.mrb[0].mxu0
  %v1149 = vadd.f32 0.0, %v1148
  %v1150 = vpop.f32.mrb[0].mxu0
  %v1151 = vpop.f32.mrb[0].mxu0
  %v1152 = vpop.f32.mrb[0].mxu0
  %1153 = vdwg.mxu0
  %v1155 = vrot.slane %v1149, 2
  %v1157 = vadd.f32 %v851, %v1155
  %v1158 = vxor.u32 %v1157, 2147483648
  %v1159 = vmul.f32 %v1158, 1.442695
  %v1160 = vpow.pop %v1159
  %v1161 = vadd.f32 %v1160, 1.0
  %v1162 = vrcp.pop %v1161
  %v1163 = vmul.f32 1.0, %v1162
  %v1164 = vtanh.pop %v1157
  %v1166 = vrot.slane %v1094, 6
  %v1168 = vmul.f32 %v1163, %v1166
  %1170 = vrot.lane.b32.xlu0 %v1164, 64
  %v1171 = vpop.permute.xlu0 %1170
  %v1173 = vmul.f32 %v1163, %v1171
  %1175 = vrot.lane.b32.xlu0 %v1173, 32
  %v1176 = vpop.permute.xlu0 %1175
  %v1178 = vadd.f32 %v1168, %v1176
  %v1179 = vtanh.pop %v1178
  %1181 = vrot.lane.b32.xlu0 %v1179, 64
  %v1182 = vpop.permute.xlu0 %1181
  %v1184 = vmul.f32 %v1163, %v1182
  %1186 = vrot.lane.b32.xlu0 %v1184, 32
  %v1187 = vpop.permute.xlu0 %1186
  %1189 = vst.msk [vmem:[#allocation3] sm:$0xc0] %vm453, %v1187
  %v1190 = vpack.c.bf16 %v1184, %v1184
  %v1192 = vrot.slane %v1190, 3
  %1193 = vrot.lane.b32.xlu0 %v1192, 32
  %v1194 = vpop.permute.xlu0 %1193
  %v1196 = vsel %vm126, %v1194, 0
  %1198 = vmatprep.subr.bf16.mxu0 0
  %1199 = vmatpush1.bf16.msra.mxu0 %v865
  %1200 = vmatprep.subr.bf16.mxu0 0
  %1201 = vmatpush1.bf16.msra.mxu0 %v866
  %1202 = vmatprep.subr.bf16.mxu0 0
  %1203 = vmatpush1.bf16.msra.mxu0 0
  %1204 = vmatprep.subr.bf16.mxu0 0
  %1205 = vmatpush1.bf16.msra.mxu0 0
  %1206 = vmatprep.subr.bf16.mxu0 0
  %1207 = vmatpush1.bf16.msra.mxu0 0
  %1208 = vmatprep.subr.bf16.mxu0 0
  %1209 = vmatpush1.bf16.msra.mxu0 0
  %1210 = vmatprep.subr.bf16.mxu0 0
  %1211 = vmatpush1.bf16.msra.mxu0 0
  %1212 = vmatprep.subr.bf16.mxu0 0
  %1213 = vmatpush1.bf16.msra.mxu0 0
  %1214 = vmatprep.subr.bf16.mxu0 0
  %1215 = vmatpush1.bf16.msra.mxu0 0
  %1216 = vmatprep.subr.bf16.mxu0 0
  %1217 = vmatpush1.bf16.msra.mxu0 0
  %1218 = vmatprep.subr.bf16.mxu0 0
  %1219 = vmatpush1.bf16.msra.mxu0 0
  %1220 = vmatprep.subr.bf16.mxu0 0
  %1221 = vmatpush1.bf16.msra.mxu0 0
  %1222 = vmatprep.subr.bf16.mxu0 0
  %1223 = vmatpush1.bf16.msra.mxu0 0
  %1224 = vmatprep.subr.bf16.mxu0 0
  %1225 = vmatpush1.bf16.msra.mxu0 0
  %1226 = vmatprep.subr.bf16.mxu0 0
  %1227 = vmatpush1.bf16.msra.mxu0 0
  %1228 = vmatprep.subr.bf16.mxu0 0
  %1229 = vmatpush1.bf16.msra.mxu0 0
  %1230 = vmatprep.mubr.bf16.mxu0 0
  %1231 = vmatmul.mubr.bf16.gmra.mrb[0].mxu0 %v1196
  %v1232 = vpop.f32.mrb[0].mxu0
  %v1233 = vadd.f32 0.0, %v1232
  %v1234 = vpop.f32.mrb[0].mxu0
  %v1235 = vpop.f32.mrb[0].mxu0
  %v1236 = vpop.f32.mrb[0].mxu0
  %1237 = vdwg.mxu0
  %v1238 = vadd.f32 %v854, %v1233
  %v1239 = vxor.u32 %v1238, 2147483648
  %v1240 = vmul.f32 %v1239, 1.442695
  %v1241 = vpow.pop %v1240
  %v1242 = vadd.f32 %v1241, 1.0
  %v1243 = vrcp.pop %v1242
  %v1244 = vmul.f32 1.0, %v1243
  %v1245 = vtanh.pop %v1238
  %v1247 = vrot.slane %v1178, 6
  %v1249 = vmul.f32 %v1244, %v1247
  %1251 = vrot.lane.b32.xlu0 %v1245, 64
  %v1252 = vpop.permute.xlu0 %1251
  %v1254 = vmul.f32 %v1244, %v1252
  %1256 = vrot.lane.b32.xlu0 %v1254, 32
  %v1257 = vpop.permute.xlu0 %1256
  %v1259 = vadd.f32 %v1249, %v1257
  %v1260 = vtanh.pop %v1259
  %1262 = vrot.lane.b32.xlu0 %v1260, 64
  %v1263 = vpop.permute.xlu0 %1262
  %v1265 = vmul.f32 %v1244, %v1263
  %1267 = vrot.lane.b32.xlu0 %v1265, 32
  %v1268 = vpop.permute.xlu0 %1267
  %1270 = vst.msk [vmem:[#allocation3 + $0x8] sm:$0x3] %vm199, %v1268
  %v1271 = vpack.c.bf16 %v1265, %v1265
  %1273 = vrot.lane.b32.xlu0 %v1271, 32
  %v1274 = vpop.permute.xlu0 %1273
  %v1276 = vsel %vm126, %v1274, 0
  %1278 = vmatprep.subr.bf16.mxu0 0
  %1279 = vmatpush1.bf16.msra.mxu0 %v865
  %1280 = vmatprep.subr.bf16.mxu0 0
  %1281 = vmatpush1.bf16.msra.mxu0 %v866
  %1282 = vmatprep.subr.bf16.mxu0 0
  %1283 = vmatpush1.bf16.msra.mxu0 0
  %1284 = vmatprep.subr.bf16.mxu0 0
  %1285 = vmatpush1.bf16.msra.mxu0 0
  %1286 = vmatprep.subr.bf16.mxu0 0
  %1287 = vmatpush1.bf16.msra.mxu0 0
  %1288 = vmatprep.subr.bf16.mxu0 0
  %1289 = vmatpush1.bf16.msra.mxu0 0
  %1290 = vmatprep.subr.bf16.mxu0 0
  %1291 = vmatpush1.bf16.msra.mxu0 0
  %1292 = vmatprep.subr.bf16.mxu0 0
  %1293 = vmatpush1.bf16.msra.mxu0 0
  %1294 = vmatprep.subr.bf16.mxu0 0
  %1295 = vmatpush1.bf16.msra.mxu0 0
  %1296 = vmatprep.subr.bf16.mxu0 0
  %1297 = vmatpush1.bf16.msra.mxu0 0
  %1298 = vmatprep.subr.bf16.mxu0 0
  %1299 = vmatpush1.bf16.msra.mxu0 0
  %1300 = vmatprep.subr.bf16.mxu0 0
  %1301 = vmatpush1.bf16.msra.mxu0 0
  %1302 = vmatprep.subr.bf16.mxu0 0
  %1303 = vmatpush1.bf16.msra.mxu0 0
  %1304 = vmatprep.subr.bf16.mxu0 0
  %1305 = vmatpush1.bf16.msra.mxu0 0
  %1306 = vmatprep.subr.bf16.mxu0 0
  %1307 = vmatpush1.bf16.msra.mxu0 0
  %1308 = vmatprep.subr.bf16.mxu0 0
  %1309 = vmatpush1.bf16.msra.mxu0 0
  %1310 = vmatprep.mubr.bf16.mxu0 0
  %1311 = vmatmul.mubr.bf16.gmra.mrb[0].mxu0 %v1276
  %v1312 = vpop.f32.mrb[0].mxu0
  %v1313 = vadd.f32 0.0, %v1312
  %v1314 = vpop.f32.mrb[0].mxu0
  %v1315 = vpop.f32.mrb[0].mxu0
  %v1316 = vpop.f32.mrb[0].mxu0
  %1317 = vdwg.mxu0
  %v1319 = vrot.slane %v1313, 6
  %v1321 = vadd.f32 %v854, %v1319
  %v1322 = vxor.u32 %v1321, 2147483648
  %v1323 = vmul.f32 %v1322, 1.442695
  %v1324 = vpow.pop %v1323
  %v1325 = vadd.f32 %v1324, 1.0
  %v1326 = vrcp.pop %v1325
  %v1327 = vmul.f32 1.0, %v1326
  %v1328 = vtanh.pop %v1321
  %v1330 = vrot.slane %v1259, 6
  %v1332 = vmul.f32 %v1327, %v1330
  %1334 = vrot.lane.b32.xlu0 %v1328, 64
  %v1335 = vpop.permute.xlu0 %1334
  %v1337 = vmul.f32 %v1327, %v1335
  %1339 = vrot.lane.b32.xlu0 %v1337, 32
  %v1340 = vpop.permute.xlu0 %1339
  %v1342 = vadd.f32 %v1332, %v1340
  %v1343 = vtanh.pop %v1342
  %1345 = vrot.lane.b32.xlu0 %v1343, 64
  %v1346 = vpop.permute.xlu0 %1345
  %v1348 = vmul.f32 %v1327, %v1346
  %1350 = vrot.lane.b32.xlu0 %v1348, 32
  %v1351 = vpop.permute.xlu0 %1350
  %1353 = vst.msk [vmem:[#allocation3 + $0x8] sm:$0xc] %vm283, %v1351
  %v1354 = vpack.c.bf16 %v1348, %v1348
  %v1356 = vrot.slane %v1354, 1
  %1357 = vrot.lane.b32.xlu0 %v1356, 32
  %v1358 = vpop.permute.xlu0 %1357
  %v1360 = vsel %vm126, %v1358, 0
  %1362 = vmatprep.subr.bf16.mxu0 0
  %1363 = vmatpush1.bf16.msra.mxu0 %v865
  %1364 = vmatprep.subr.bf16.mxu0 0
  %1365 = vmatpush1.bf16.msra.mxu0 %v866
  %1366 = vmatprep.subr.bf16.mxu0 0
  %1367 = vmatpush1.bf16.msra.mxu0 0
  %1368 = vmatprep.subr.bf16.mxu0 0
  %1369 = vmatpush1.bf16.msra.mxu0 0
  %1370 = vmatprep.subr.bf16.mxu0 0
  %1371 = vmatpush1.bf16.msra.mxu0 0
  %1372 = vmatprep.subr.bf16.mxu0 0
  %1373 = vmatpush1.bf16.msra.mxu0 0
  %1374 = vmatprep.subr.bf16.mxu0 0
  %1375 = vmatpush1.bf16.msra.mxu0 0
  %1376 = vmatprep.subr.bf16.mxu0 0
  %1377 = vmatpush1.bf16.msra.mxu0 0
  %1378 = vmatprep.subr.bf16.mxu0 0
  %1379 = vmatpush1.bf16.msra.mxu0 0
  %1380 = vmatprep.subr.bf16.mxu0 0
  %1381 = vmatpush1.bf16.msra.mxu0 0
  %1382 = vmatprep.subr.bf16.mxu0 0
  %1383 = vmatpush1.bf16.msra.mxu0 0
  %1384 = vmatprep.subr.bf16.mxu0 0
  %1385 = vmatpush1.bf16.msra.mxu0 0
  %1386 = vmatprep.subr.bf16.mxu0 0
  %1387 = vmatpush1.bf16.msra.mxu0 0
  %1388 = vmatprep.subr.bf16.mxu0 0
  %1389 = vmatpush1.bf16.msra.mxu0 0
  %1390 = vmatprep.subr.bf16.mxu0 0
  %1391 = vmatpush1.bf16.msra.mxu0 0
  %1392 = vmatprep.subr.bf16.mxu0 0
  %1393 = vmatpush1.bf16.msra.mxu0 0
  %1394 = vmatprep.mubr.bf16.mxu0 0
  %1395 = vmatmul.mubr.bf16.gmra.mrb[0].mxu0 %v1360
  %v1396 = vpop.f32.mrb[0].mxu0
  %v1397 = vadd.f32 0.0, %v1396
  %v1398 = vpop.f32.mrb[0].mxu0
  %v1399 = vpop.f32.mrb[0].mxu0
  %v1400 = vpop.f32.mrb[0].mxu0
  %1401 = vdwg.mxu0
  %v1403 = vrot.slane %v1397, 4
  %v1405 = vadd.f32 %v854, %v1403
  %v1406 = vxor.u32 %v1405, 2147483648
  %v1407 = vmul.f32 %v1406, 1.442695
  %v1408 = vpow.pop %v1407
  %v1409 = vadd.f32 %v1408, 1.0
  %v1410 = vrcp.pop %v1409
  %v1411 = vmul.f32 1.0, %v1410
  %v1412 = vtanh.pop %v1405
  %v1414 = vrot.slane %v1342, 6
  %v1416 = vmul.f32 %v1411, %v1414
  %1418 = vrot.lane.b32.xlu0 %v1412, 64
  %v1419 = vpop.permute.xlu0 %1418
  %v1421 = vmul.f32 %v1411, %v1419
  %1423 = vrot.lane.b32.xlu0 %v1421, 32
  %v1424 = vpop.permute.xlu0 %1423
  %v1426 = vadd.f32 %v1416, %v1424
  %v1427 = vtanh.pop %v1426
  %1429 = vrot.lane.b32.xlu0 %v1427, 64
  %v1430 = vpop.permute.xlu0 %1429
  %v1432 = vmul.f32 %v1411, %v1430
  %1434 = vrot.lane.b32.xlu0 %v1432, 32
  %v1435 = vpop.permute.xlu0 %1434
  %1437 = vst.msk [vmem:[#allocation3 + $0x8] sm:$0x30] %vm368, %v1435
  %v1438 = vpack.c.bf16 %v1432, %v1432
  %v1440 = vrot.slane %v1438, 2
  %1441 = vrot.lane.b32.xlu0 %v1440, 32
  %v1442 = vpop.permute.xlu0 %1441
  %v1444 = vsel %vm126, %v1442, 0
  %1446 = vmatprep.subr.bf16.mxu0 0
  %1447 = vmatpush1.bf16.msra.mxu0 %v865
  %1448 = vmatprep.subr.bf16.mxu0 0
  %1449 = vmatpush1.bf16.msra.mxu0 %v866
  %1450 = vmatprep.subr.bf16.mxu0 0
  %1451 = vmatpush1.bf16.msra.mxu0 0
  %1452 = vmatprep.subr.bf16.mxu0 0
  %1453 = vmatpush1.bf16.msra.mxu0 0
  %1454 = vmatprep.subr.bf16.mxu0 0
  %1455 = vmatpush1.bf16.msra.mxu0 0
  %1456 = vmatprep.subr.bf16.mxu0 0
  %1457 = vmatpush1.bf16.msra.mxu0 0
  %1458 = vmatprep.subr.bf16.mxu0 0
  %1459 = vmatpush1.bf16.msra.mxu0 0
  %1460 = vmatprep.subr.bf16.mxu0 0
  %1461 = vmatpush1.bf16.msra.mxu0 0
  %1462 = vmatprep.subr.bf16.mxu0 0
  %1463 = vmatpush1.bf16.msra.mxu0 0
  %1464 = vmatprep.subr.bf16.mxu0 0
  %1465 = vmatpush1.bf16.msra.mxu0 0
  %1466 = vmatprep.subr.bf16.mxu0 0
  %1467 = vmatpush1.bf16.msra.mxu0 0
  %1468 = vmatprep.subr.bf16.mxu0 0
  %1469 = vmatpush1.bf16.msra.mxu0 0
  %1470 = vmatprep.subr.bf16.mxu0 0
  %1471 = vmatpush1.bf16.msra.mxu0 0
  %1472 = vmatprep.subr.bf16.mxu0 0
  %1473 = vmatpush1.bf16.msra.mxu0 0
  %1474 = vmatprep.subr.bf16.mxu0 0
  %1475 = vmatpush1.bf16.msra.mxu0 0
  %1476 = vmatprep.subr.bf16.mxu0 0
  %1477 = vmatpush1.bf16.msra.mxu0 0
  %1478 = vmatprep.mubr.bf16.mxu0 0
  %1479 = vmatmul.mubr.bf16.gmra.mrb[0].mxu0 %v1444
  %v1480 = vpop.f32.mrb[0].mxu0
  %v1481 = vadd.f32 0.0, %v1480
  %v1482 = vpop.f32.mrb[0].mxu0
  %v1483 = vpop.f32.mrb[0].mxu0
  %v1484 = vpop.f32.mrb[0].mxu0
  %1485 = vdwg.mxu0
  %v1487 = vrot.slane %v1481, 2
  %v1489 = vadd.f32 %v854, %v1487
  %v1490 = vxor.u32 %v1489, 2147483648
  %v1491 = vmul.f32 %v1490, 1.442695
  %v1492 = vpow.pop %v1491
  %v1493 = vadd.f32 %v1492, 1.0
  %v1494 = vrcp.pop %v1493
  %v1495 = vmul.f32 1.0, %v1494
  %v1496 = vtanh.pop %v1489
  %v1498 = vrot.slane %v1426, 6
  %v1500 = vmul.f32 %v1495, %v1498
  %1502 = vrot.lane.b32.xlu0 %v1496, 64
  %v1503 = vpop.permute.xlu0 %1502
  %v1505 = vmul.f32 %v1495, %v1503
  %1507 = vrot.lane.b32.xlu0 %v1505, 32
  %v1508 = vpop.permute.xlu0 %1507
  %v1510 = vadd.f32 %v1500, %v1508
  %v1511 = vtanh.pop %v1510
  %1513 = vrot.lane.b32.xlu0 %v1511, 64
  %v1514 = vpop.permute.xlu0 %1513
  %v1516 = vmul.f32 %v1495, %v1514
  %1518 = vrot.lane.b32.xlu0 %v1516, 32
  %v1519 = vpop.permute.xlu0 %1518
  %1521 = vst.msk [vmem:[#allocation3 + $0x8] sm:$0xc0] %vm453, %v1519
  %v1522 = vld [vmem:[#allocation3] sm:$0xff]
  %v1523 = vld [vmem:[#allocation3 + $0x8] sm:$0xff]
  %v1524 = vpack.c.bf16 %v1523, %v1522
  %v1525 = vld [vmem:[%s7] sm:$0xf]
  %v1526 = vld [vmem:[%s7 + $0x4] sm:$0xf]
  %v1527 = vld [vmem:[%s7 + $0x8] sm:$0xf]
  %v1528 = vld [vmem:[%s7 + $0xc] sm:$0xf]
  %v1529 = vld [vmem:[%s8] sm:$0x1]
  %v1531 = vlaneseq
  %v1532 = vshrl.u32 %v1531, 7
  %v1533 = vsub.s32 0, %v1532
  %v1534 = vrot.slane %v1529, %v1533
  %v1540 = vunpack.c.l.b16 %v1525
  %v1541 = vunpack.c.l.b16 %v1526
  %v1542 = vunpack.c.l.b16 %v1527
  %v1543 = vunpack.c.l.b16 %v1528
  %v1544 = vpack.c.b16 %v1541, %v1540
  %v1545 = vpack.c.b16 %v1543, %v1542
  %v1549 = vsel %vm126, %v1524, 0
  %1551 = vmatprep.subr.bf16.mxu0 0
  %1552 = vmatpush1.bf16.msra.mxu0 %v1544
  %1553 = vmatprep.subr.bf16.mxu0 0
  %1554 = vmatpush1.bf16.msra.mxu0 %v1545
  %1555 = vmatprep.subr.bf16.mxu0 0
  %1556 = vmatpush1.bf16.msra.mxu0 0
  %1557 = vmatprep.subr.bf16.mxu0 0
  %1558 = vmatpush1.bf16.msra.mxu0 0
  %1559 = vmatprep.subr.bf16.mxu0 0
  %1560 = vmatpush1.bf16.msra.mxu0 0
  %1561 = vmatprep.subr.bf16.mxu0 0
  %1562 = vmatpush1.bf16.msra.mxu0 0
  %1563 = vmatprep.subr.bf16.mxu0 0
  %1564 = vmatpush1.bf16.msra.mxu0 0
  %1565 = vmatprep.subr.bf16.mxu0 0
  %1566 = vmatpush1.bf16.msra.mxu0 0
  %1567 = vmatprep.subr.bf16.mxu0 0
  %1568 = vmatpush1.bf16.msra.mxu0 0
  %1569 = vmatprep.subr.bf16.mxu0 0
  %1570 = vmatpush1.bf16.msra.mxu0 0
  %1571 = vmatprep.subr.bf16.mxu0 0
  %1572 = vmatpush1.bf16.msra.mxu0 0
  %1573 = vmatprep.subr.bf16.mxu0 0
  %1574 = vmatpush1.bf16.msra.mxu0 0
  %1575 = vmatprep.subr.bf16.mxu0 0
  %1576 = vmatpush1.bf16.msra.mxu0 0
  %1577 = vmatprep.subr.bf16.mxu0 0
  %1578 = vmatpush1.bf16.msra.mxu0 0
  %1579 = vmatprep.subr.bf16.mxu0 0
  %1580 = vmatpush1.bf16.msra.mxu0 0
  %1581 = vmatprep.subr.bf16.mxu0 0
  %1582 = vmatpush1.bf16.msra.mxu0 0
  %1583 = vmatprep.mubr.bf16.mxu0 0
  %1584 = vmatmul.mubr.bf16.gmra.mrb[0].mxu0 %v1549
  %v1585 = vpop.f32.mrb[0].mxu0
  %v1586 = vadd.f32 %v1534, %v1585
  %v1587 = vpop.f32.mrb[0].mxu0
  %v1588 = vpop.f32.mrb[0].mxu0
  %v1589 = vadd.f32 %v1534, %v1588
  %v1590 = vpop.f32.mrb[0].mxu0
  %1591 = vdwg.mxu0
  %v1592 = vmax.f32 %v1586, 0.0
  %v1593 = vmax.f32 %v1589, 0.0
  %v1594 = vpack.c.bf16 %v1593, %v1592
  %v1595 = vld [vmem:[%s9] sm:$0xf]
  %v1596 = vld [vmem:[%s9 + $0x4] sm:$0xf]
  %v1597 = vld [vmem:[%s9 + $0x8] sm:$0xf]
  %v1598 = vld [vmem:[%s9 + $0xc] sm:$0xf]
  %v1599 = vld [vmem:[%s10] sm:$0x1]
  %v1601 = vlaneseq
  %v1602 = vshrl.u32 %v1601, 7
  %v1603 = vsub.s32 0, %v1602
  %v1604 = vrot.slane %v1599, %v1603
  %v1610 = vunpack.c.l.b16 %v1595
  %v1611 = vunpack.c.l.b16 %v1596
  %v1612 = vunpack.c.l.b16 %v1597
  %v1613 = vunpack.c.l.b16 %v1598
  %v1614 = vpack.c.b16 %v1611, %v1610
  %v1615 = vpack.c.b16 %v1613, %v1612
  %v1619 = vsel %vm126, %v1594, 0
  %1621 = vmatprep.subr.bf16.mxu0 0
  %1622 = vmatpush1.bf16.msra.mxu0 %v1614
  %1623 = vmatprep.subr.bf16.mxu0 0
  %1624 = vmatpush1.bf16.msra.mxu0 %v1615
  %1625 = vmatprep.subr.bf16.mxu0 0
  %1626 = vmatpush1.bf16.msra.mxu0 0
  %1627 = vmatprep.subr.bf16.mxu0 0
  %1628 = vmatpush1.bf16.msra.mxu0 0
  %1629 = vmatprep.subr.bf16.mxu0 0
  %1630 = vmatpush1.bf16.msra.mxu0 0
  %1631 = vmatprep.subr.bf16.mxu0 0
  %1632 = vmatpush1.bf16.msra.mxu0 0
  %1633 = vmatprep.subr.bf16.mxu0 0
  %1634 = vmatpush1.bf16.msra.mxu0 0
  %1635 = vmatprep.subr.bf16.mxu0 0
  %1636 = vmatpush1.bf16.msra.mxu0 0
  %1637 = vmatprep.subr.bf16.mxu0 0
  %1638 = vmatpush1.bf16.msra.mxu0 0
  %1639 = vmatprep.subr.bf16.mxu0 0
  %1640 = vmatpush1.bf16.msra.mxu0 0
  %1641 = vmatprep.subr.bf16.mxu0 0
  %1642 = vmatpush1.bf16.msra.mxu0 0
  %1643 = vmatprep.subr.bf16.mxu0 0
  %1644 = vmatpush1.bf16.msra.mxu0 0
  %1645 = vmatprep.subr.bf16.mxu0 0
  %1646 = vmatpush1.bf16.msra.mxu0 0
  %1647 = vmatprep.subr.bf16.mxu0 0
  %1648 = vmatpush1.bf16.msra.mxu0 0
  %1649 = vmatprep.subr.bf16.mxu0 0
  %1650 = vmatpush1.bf16.msra.mxu0 0
  %1651 = vmatprep.subr.bf16.mxu0 0
  %1652 = vmatpush1.bf16.msra.mxu0 0
  %1653 = vmatprep.mubr.bf16.mxu0 0
  %1654 = vmatmul.mubr.bf16.gmra.mrb[0].mxu0 %v1619
  %v1655 = vpop.f32.mrb[0].mxu0
  %v1656 = vadd.f32 %v1604, %v1655
  %v1657 = vpop.f32.mrb[0].mxu0
  %v1658 = vpop.f32.mrb[0].mxu0
  %v1659 = vadd.f32 %v1604, %v1658
  %v1660 = vpop.f32.mrb[0].mxu0
  %1661 = vdwg.mxu0
  %1662 = vst [vmem:[%s11] sm:$0xff] %v1656
  %1663 = vst [vmem:[%s11 + $0x8] sm:$0xff] %v1659
  // Predicated region
  $region46: #{lstm_decomposer_forward.1} parent=0 // pred_check
    _
  $region47: #{lstm_decomposer_forward.1} parent=0 // pred_check_branch
    %1665 = sbr.rel (0) target = $region49
  $region48: #{lstm_decomposer_forward.1} parent=0 // pred_region
    _
  $region49: #{lstm_decomposer_forward.1} parent=0 // pred_fallthru
    _
  // Predicated region
  $region50: #{lstm_decomposer_forward.1} parent=0 // pred_check
    _
  $region51: #{lstm_decomposer_forward.1} parent=0 // pred_check_branch
    %1667 = sbr.rel (0) target = $region53
  $region52: #{lstm_decomposer_forward.1} parent=0 // pred_region
    _
  $region53: #{lstm_decomposer_forward.1} parent=0 // pred_fallthru
    _

</llo_original>
